<compile_context>
chip_gen: v5e
topology: v5e:2x2
jax: 0.10.0
libtpu: 0.0.40
codegen_flags: <defaults>
</compile_context>

<pallas_src>
import math
import functools

import jax
import jax.numpy as jnp
from jax.experimental import pallas as pl
from jax.experimental.pallas import tpu as pltpu

# ---------------- small config (mirrors the PyTorch config fields) -----------
D_MODEL = 32
NUM_HEADS = 4
D_HEAD = D_MODEL // NUM_HEADS
FF_DIM = 64
NUM_LAYERS = 2
NUM_BUCKETS = 32
MAX_DISTANCE = 128
VOCAB = 50
LN_EPS = 1e-6
BATCH = 2
SEQ = 8


# ----------------------------- fused Pallas kernel ---------------------------
def t5_encoder_kernel(x_ref, bias_ref, norms_ref, wqkv_ref, wo_ref,
                      w1_ref, w2_ref, out_ref, attn_ref,
                      *, num_layers, num_heads, batch, seq, d_head, d_model,
                      eps):
    """Whole T5 encoder (all layers + final norm) in one kernel invocation.

    x_ref    : (B*S, D)              bias_ref : (L, H*B, S, S)  (pos bias + mask)
    norms_ref: (2L+1, 1, D)          wqkv_ref : (L, D, 3D)
    wo_ref   : (L, D, D)             w1_ref   : (L, D, F)     w2_ref : (L, F, D)
    out_ref  : (B*S, D)              attn_ref : (L, H*B, S, S)
    """
    H, B, S, dh, D = num_heads, batch, seq, d_head, d_model

    def rms_norm(h, w):                      # T5 RMSNorm: no mean, no bias
        var = jnp.mean(h * h, axis=-1, keepdims=True)
        return h * jax.lax.rsqrt(var + eps) * w

    x = x_ref[...]                           # (B*S, D), stays resident

    for l in range(num_layers):              # static unroll, L is tiny
        # --- self_attention_norm ---
        xn = rms_norm(x, norms_ref[l])       # (B*S, D)

        # --- fused QKV projection: one wide matmul ---
        qkv = jnp.dot(xn, wqkv_ref[l],
                      preferred_element_type=jnp.float32)       # (B*S, 3D)

        # --- split heads into a fused (H*B) batch axis --------------------
        # static lane slices + leading-dim-only reshapes (safe in Mosaic)
        def gather_heads(col0):
            return jnp.concatenate(
                [qkv[:, col0 + h * dh: col0 + (h + 1) * dh].reshape(B, S, dh)
                 for h in range(H)], axis=0)                    # (H*B, S, dh)

        q_x = gather_heads(0)
        k_x = gather_heads(D)
        v_x = gather_heads(2 * D)

        # --- scores for all heads/batches in ONE batched contraction ------
        # T5-style attention: no 1/sqrt(d_head) scaling.
        scores = jnp.einsum('xqd,xkd->xqk', q_x, k_x,
                            preferred_element_type=jnp.float32)  # (H*B, S, S)
        scores = scores + bias_ref[l]

        # --- softmax (exact division, matches the reference) --------------
        m = jnp.max(scores, axis=-1, keepdims=True)
        e = jnp.exp(scores - m)
        p = e / jnp.sum(e, axis=-1, keepdims=True)               # (H*B, S, S)
        attn_ref[l] = p                                          # 1 store/layer

        # --- context for all heads in ONE batched contraction -------------
        ctx = jnp.einsum('xqk,xkd->xqd', p, v_x,
                         preferred_element_type=jnp.float32)     # (H*B, S, dh)

        # --- re-merge heads along lanes, single output projection ---------
        z = jnp.concatenate([ctx[h * B:(h + 1) * B].reshape(B * S, dh)
                             for h in range(H)], axis=-1)        # (B*S, H*dh)
        x = x + jnp.dot(z, wo_ref[l],
                        preferred_element_type=jnp.float32)      # residual 1

        # --- feed_forward_norm + FFN ---
        hn = rms_norm(x, norms_ref[num_layers + l])
        ff = jnp.maximum(jnp.dot(hn, w1_ref[l],
                                 preferred_element_type=jnp.float32), 0.0)
        ff = jnp.dot(ff, w2_ref[l], preferred_element_type=jnp.float32)
        x = x + ff                                               # residual 2

    out_ref[...] = rms_norm(x, norms_ref[2 * num_layers])        # final norm


# -------------------- relative position bias (glue, plain JAX) ---------------
def _relative_position_bucket(relative_position, num_buckets=NUM_BUCKETS,
                              max_distance=MAX_DISTANCE):
    # bidirectional=True branch of the PyTorch code
    nb = num_buckets // 2
    rb = (relative_position > 0).astype(jnp.int32) * nb
    rp = jnp.abs(relative_position)
    max_exact = nb // 2
    is_small = rp < max_exact
    rp_safe = jnp.maximum(rp, 1).astype(jnp.float32)
    large = max_exact + (jnp.log(rp_safe / max_exact)
                         / math.log(max_distance / max_exact)
                         * (nb - max_exact)).astype(jnp.int32)
    large = jnp.minimum(large, nb - 1)
    return rb + jnp.where(is_small, rp, large)


def compute_position_bias(rel_emb, q_len, k_len):
    ctx = jnp.arange(q_len, dtype=jnp.int32)[:, None]
    mem = jnp.arange(k_len, dtype=jnp.int32)[None, :]
    bucket = _relative_position_bucket(mem - ctx)              # (Q, K)
    values = rel_emb[bucket]                                   # (Q, K, H)
    return jnp.transpose(values, (2, 0, 1))                    # (H, Q, K)


def get_extended_attention_mask(attention_mask):
    # Matches the PyTorch helper: it casts through float16, so the additive
    # mask value is finfo(float16).min (-65504) even for fp32 activations.
    ext = attention_mask[:, None, None, :].astype(jnp.float32)   # (B,1,1,S)
    return (1.0 - ext) * float(jnp.finfo(jnp.float16).min)


# ---------------------------- full encoder ------------------------------------
def t5_encoder(input_ids, attention_mask, params):
    B, S = input_ids.shape
    layers = params["layers"]
    L, H, D, dh, F = len(layers), NUM_HEADS, D_MODEL, D_HEAD, FF_DIM

    self_attention_mask = get_extended_attention_mask(attention_mask)  # (B,1,1,S)
    neg_mask = self_attention_mask[:, 0, 0, :]                         # (B, S)

    # embedding lookup (integer gather) stays in plain JAX outside the kernel
    x = params["emb"][input_ids].reshape(B * S, D)

    # --- pack parameters into few contiguous stacked arrays (wrapper side) ---
    norms = jnp.concatenate(
        [jnp.stack([lp["ln1"] for lp in layers]),                # (L,1,D)
         jnp.stack([lp["ln2"] for lp in layers]),                # (L,1,D)
         params["final_ln"][None]], axis=0)                      # (2L+1,1,D)
    wqkv = jnp.stack([jnp.concatenate([lp["wq"], lp["wk"], lp["wv"]], axis=1)
                      for lp in layers])                         # (L, D, 3D)
    wo = jnp.stack([lp["wo"] for lp in layers])                  # (L, D, D)
    w1 = jnp.stack([lp["w1"] for lp in layers])                  # (L, D, F)
    w2 = jnp.stack([lp["w2"] for lp in layers])                  # (L, F, D)

    # per-layer position bias + additive mask, precomputed once, laid out to
    # match the kernel's fused (H*B) batch axis
    pb = jnp.stack([compute_position_bias(lp["rel_emb"], S, S)
                    for lp in layers])                           # (L,H,S,S)
    bias = pb[:, :, None, :, :] + neg_mask[None, None, :, None, :]  # (L,H,B,S,S)
    bias = bias.reshape(L, H * B, S, S).astype(jnp.float32)

    kernel = functools.partial(
        t5_encoder_kernel, num_layers=L, num_heads=H, batch=B, seq=S,
        d_head=dh, d_model=D, eps=LN_EPS)

    def full(shape):
        n = len(shape)
        return pl.BlockSpec(shape, lambda i: (0,) * n)

    out, attn = pl.pallas_call(
        kernel,
        grid=(1,),                      # single step: everything fits in VMEM
        out_shape=(jax.ShapeDtypeStruct((B * S, D), jnp.float32),
                   jax.ShapeDtypeStruct((L, H * B, S, S), jnp.float32)),
        in_specs=[full((B * S, D)),
                  full((L, H * B, S, S)),
                  full((2 * L + 1, 1, D)),
                  full((L, D, 3 * D)),
                  full((L, D, D)),
                  full((L, D, F)),
                  full((L, F, D))],
        out_specs=(full((B * S, D)), full((L, H * B, S, S))),
        compiler_params=pltpu.CompilerParams(
            dimension_semantics=("arbitrary",)),
    )(x, bias, norms, wqkv, wo, w1, w2)

    out = out.reshape(B, S, D)
    attn = attn.reshape(L, H, B, S, S).transpose(0, 2, 1, 3, 4)  # (L,B,H,S,S)
    attn_probs = [attn[l] for l in range(L)]
    # final dropout -> identity (eval)
    return out, attn_probs, self_attention_mask


# ---------------------------- parameter init ----------------------------------
def init_params(key):
    def nrm(k, shape, scale=0.02):
        return jax.random.normal(k, shape, dtype=jnp.float32) * scale

    keys = jax.random.split(key, 2 + NUM_LAYERS * 8)
    params = {
        "emb": nrm(keys[0], (VOCAB, D_MODEL)),
        "final_ln": jnp.ones((1, D_MODEL), jnp.float32),
        "layers": [],
    }
    ki = 1
    for _ in range(NUM_LAYERS):
        lp = {
            "ln1": jnp.ones((1, D_MODEL), jnp.float32),
            "wq": nrm(keys[ki + 0], (D_MODEL, D_MODEL)),
            "wk": nrm(keys[ki + 1], (D_MODEL, D_MODEL)),
            "wv": nrm(keys[ki + 2], (D_MODEL, D_MODEL)),
            "wo": nrm(keys[ki + 3], (D_MODEL, D_MODEL)),
            "rel_emb": nrm(keys[ki + 4], (NUM_BUCKETS, NUM_HEADS)),
            "ln2": jnp.ones((1, D_MODEL), jnp.float32),
            "w1": nrm(keys[ki + 5], (D_MODEL, FF_DIM)),
            "w2": nrm(keys[ki + 6], (FF_DIM, D_MODEL)),
        }
        ki += 8
        params["layers"].append(lp)
    return params


if __name__ == "__main__":
    key = jax.random.PRNGKey(0)
    k_ids, k_par = jax.random.split(key)
    input_ids = jax.random.randint(k_ids, (BATCH, SEQ), 0, VOCAB,
                                   dtype=jnp.int32)
    # deterministic padding mask: last two tokens of batch 1 are padding
    attention_mask = jnp.array(
        [[1] * SEQ, [1] * (SEQ - 2) + [0, 0]], dtype=jnp.int32)

    params = init_params(k_par)

    encoder = jax.jit(t5_encoder)
    out, attn_probs, ext_mask = encoder(input_ids, attention_mask, params)
    jax.block_until_ready(out)
    for ap in attn_probs:
        jax.block_until_ready(ap)

    assert out.shape == (BATCH, SEQ, D_MODEL)
    assert len(attn_probs) == NUM_LAYERS
    assert attn_probs[0].shape == (BATCH, NUM_HEADS, SEQ, SEQ)
    assert ext_mask.shape == (BATCH, 1, 1, SEQ)
    print("KERNEL_OK")
</pallas_src>

<mosaic_0001>
module attributes {stable_mosaic.version = 11 : i64} {
  func.func @t5_encoder_kernel(%arg0: i32, %arg1: memref<16x32xf32, #tpu.memory_space<vmem>>, %arg2: memref<2x8x8x8xf32, #tpu.memory_space<vmem>>, %arg3: memref<5x1x32xf32, #tpu.memory_space<vmem>>, %arg4: memref<2x32x96xf32, #tpu.memory_space<vmem>>, %arg5: memref<2x32x32xf32, #tpu.memory_space<vmem>>, %arg6: memref<2x32x64xf32, #tpu.memory_space<vmem>>, %arg7: memref<2x64x32xf32, #tpu.memory_space<vmem>>, %arg8: memref<16x32xf32, #tpu.memory_space<vmem>>, %arg9: memref<2x8x8x8xf32, #tpu.memory_space<vmem>>) attributes {dimension_semantics = [#tpu.dimension_semantics<arbitrary>], iteration_bounds = array<i64: 1>, scalar_prefetch = 0 : i64, scratch_operands = 0 : i64, tpu.core_type = #tpu.core_type<tc>, window_params = [{pipeline_mode = #tpu.pipeline_mode<synchronous>, transform_indices = @transform_0, window_bounds = array<i64: 16, 32>}, {pipeline_mode = #tpu.pipeline_mode<synchronous>, transform_indices = @transform_1, window_bounds = array<i64: 2, 8, 8, 8>}, {pipeline_mode = #tpu.pipeline_mode<synchronous>, transform_indices = @transform_2, window_bounds = array<i64: 5, 1, 32>}, {pipeline_mode = #tpu.pipeline_mode<synchronous>, transform_indices = @transform_3, window_bounds = array<i64: 2, 32, 96>}, {pipeline_mode = #tpu.pipeline_mode<synchronous>, transform_indices = @transform_4, window_bounds = array<i64: 2, 32, 32>}, {pipeline_mode = #tpu.pipeline_mode<synchronous>, transform_indices = @transform_5, window_bounds = array<i64: 2, 32, 64>}, {pipeline_mode = #tpu.pipeline_mode<synchronous>, transform_indices = @transform_6, window_bounds = array<i64: 2, 64, 32>}, {pipeline_mode = #tpu.pipeline_mode<synchronous>, transform_indices = @transform_7, window_bounds = array<i64: 16, 32>}, {pipeline_mode = #tpu.pipeline_mode<synchronous>, transform_indices = @transform_8, window_bounds = array<i64: 2, 8, 8, 8>}]} {
    %c0 = arith.constant 0 : index
    %c0_0 = arith.constant 0 : index
    %0 = vector.load %arg1[%c0, %c0_0] : memref<16x32xf32, #tpu.memory_space<vmem>>, vector<16x32xf32>
    %c0_1 = arith.constant 0 : index
    %c0_2 = arith.constant 0 : index
    %c0_3 = arith.constant 0 : index
    %1 = vector.load %arg3[%c0_1, %c0_2, %c0_3] : memref<5x1x32xf32, #tpu.memory_space<vmem>>, vector<1x1x32xf32>
    %2 = vector.shape_cast %1 : vector<1x1x32xf32> to vector<1x32xf32>
    %3 = arith.mulf %0, %0 : vector<16x32xf32>
    %cst = arith.constant dense<0.000000e+00> : vector<16xf32>
    %4 = vector.multi_reduction <add>, %3, %cst [1] : vector<16x32xf32> to vector<16xf32>
    %5 = vector.shape_cast %4 : vector<16xf32> to vector<16x1xf32>
    %cst_4 = arith.constant 3.200000e+01 : f32
    %6 = vector.broadcast %cst_4 : f32 to vector<16x1xf32>
    %7 = arith.divf %5, %6 : vector<16x1xf32>
    %cst_5 = arith.constant 9.99999997E-7 : f32
    %8 = vector.broadcast %cst_5 : f32 to vector<16x1xf32>
    %9 = arith.addf %7, %8 : vector<16x1xf32>
    %10 = math.rsqrt %9 : vector<16x1xf32>
    %11 = vector.broadcast %10 : vector<16x1xf32> to vector<16x32xf32>
    %12 = arith.mulf %0, %11 : vector<16x32xf32>
    %13 = vector.broadcast %2 : vector<1x32xf32> to vector<16x32xf32>
    %14 = arith.mulf %12, %13 : vector<16x32xf32>
    %c0_6 = arith.constant 0 : index
    %c0_7 = arith.constant 0 : index
    %c0_8 = arith.constant 0 : index
    %15 = vector.load %arg4[%c0_6, %c0_7, %c0_8] : memref<2x32x96xf32, #tpu.memory_space<vmem>>, vector<1x32x96xf32>
    %16 = vector.shape_cast %15 : vector<1x32x96xf32> to vector<32x96xf32>
    %cst_9 = arith.constant dense<0.000000e+00> : vector<16x96xf32>
    %17 = tpu.matmul %14, %16, %cst_9 {dimension_numbers = #tpu.dot_dimension_numbers<[1], [0], [0], [1], [0, 0, 1, 1], [], []>} : vector<16x32xf32>, vector<32x96xf32>, vector<16x96xf32> -> vector<16x96xf32>
    %18 = vector.extract_strided_slice %17 {offsets = [0, 0], sizes = [16, 8], strides = [1, 1]} : vector<16x96xf32> to vector<16x8xf32>
    %19 = vector.shape_cast %18 : vector<16x8xf32> to vector<2x8x8xf32>
    %20 = vector.extract_strided_slice %17 {offsets = [0, 8], sizes = [16, 8], strides = [1, 1]} : vector<16x96xf32> to vector<16x8xf32>
    %21 = vector.shape_cast %20 : vector<16x8xf32> to vector<2x8x8xf32>
    %22 = vector.extract_strided_slice %17 {offsets = [0, 16], sizes = [16, 8], strides = [1, 1]} : vector<16x96xf32> to vector<16x8xf32>
    %23 = vector.shape_cast %22 : vector<16x8xf32> to vector<2x8x8xf32>
    %24 = vector.extract_strided_slice %17 {offsets = [0, 24], sizes = [16, 8], strides = [1, 1]} : vector<16x96xf32> to vector<16x8xf32>
    %25 = vector.shape_cast %24 : vector<16x8xf32> to vector<2x8x8xf32>
    %26 = tpu.concatenate %19, %21, %23, %25 in 0 : vector<2x8x8xf32>, vector<2x8x8xf32>, vector<2x8x8xf32>, vector<2x8x8xf32> -> vector<8x8x8xf32>
    %27 = vector.extract_strided_slice %17 {offsets = [0, 32], sizes = [16, 8], strides = [1, 1]} : vector<16x96xf32> to vector<16x8xf32>
    %28 = vector.shape_cast %27 : vector<16x8xf32> to vector<2x8x8xf32>
    %29 = vector.extract_strided_slice %17 {offsets = [0, 40], sizes = [16, 8], strides = [1, 1]} : vector<16x96xf32> to vector<16x8xf32>
    %30 = vector.shape_cast %29 : vector<16x8xf32> to vector<2x8x8xf32>
    %31 = vector.extract_strided_slice %17 {offsets = [0, 48], sizes = [16, 8], strides = [1, 1]} : vector<16x96xf32> to vector<16x8xf32>
    %32 = vector.shape_cast %31 : vector<16x8xf32> to vector<2x8x8xf32>
    %33 = vector.extract_strided_slice %17 {offsets = [0, 56], sizes = [16, 8], strides = [1, 1]} : vector<16x96xf32> to vector<16x8xf32>
    %34 = vector.shape_cast %33 : vector<16x8xf32> to vector<2x8x8xf32>
    %35 = tpu.concatenate %28, %30, %32, %34 in 0 : vector<2x8x8xf32>, vector<2x8x8xf32>, vector<2x8x8xf32>, vector<2x8x8xf32> -> vector<8x8x8xf32>
    %36 = vector.extract_strided_slice %17 {offsets = [0, 64], sizes = [16, 8], strides = [1, 1]} : vector<16x96xf32> to vector<16x8xf32>
    %37 = vector.shape_cast %36 : vector<16x8xf32> to vector<2x8x8xf32>
    %38 = vector.extract_strided_slice %17 {offsets = [0, 72], sizes = [16, 8], strides = [1, 1]} : vector<16x96xf32> to vector<16x8xf32>
    %39 = vector.shape_cast %38 : vector<16x8xf32> to vector<2x8x8xf32>
    %40 = vector.extract_strided_slice %17 {offsets = [0, 80], sizes = [16, 8], strides = [1, 1]} : vector<16x96xf32> to vector<16x8xf32>
    %41 = vector.shape_cast %40 : vector<16x8xf32> to vector<2x8x8xf32>
    %42 = vector.extract_strided_slice %17 {offsets = [0, 88], sizes = [16, 8], strides = [1, 1]} : vector<16x96xf32> to vector<16x8xf32>
    %43 = vector.shape_cast %42 : vector<16x8xf32> to vector<2x8x8xf32>
    %44 = tpu.concatenate %37, %39, %41, %43 in 0 : vector<2x8x8xf32>, vector<2x8x8xf32>, vector<2x8x8xf32>, vector<2x8x8xf32> -> vector<8x8x8xf32>
    "tpu.trace_start"() <{level = 10 : i32, message = "xqd,xkd->xqk"}> : () -> ()
    %cst_10 = arith.constant dense<0.000000e+00> : vector<8x8x8xf32>
    %45 = tpu.matmul %26, %35, %cst_10 {dimension_numbers = #tpu.dot_dimension_numbers<[2], [2], [1], [1], [0, 0, 0, 1, 1, 1], [0], [0]>} : vector<8x8x8xf32>, vector<8x8x8xf32>, vector<8x8x8xf32> -> vector<8x8x8xf32>
    "tpu.trace_stop"() : () -> ()
    %c0_11 = arith.constant 0 : index
    %c0_12 = arith.constant 0 : index
    %c0_13 = arith.constant 0 : index
    %c0_14 = arith.constant 0 : index
    %46 = vector.load %arg2[%c0_11, %c0_12, %c0_13, %c0_14] : memref<2x8x8x8xf32, #tpu.memory_space<vmem>>, vector<1x8x8x8xf32>
    %47 = vector.shape_cast %46 : vector<1x8x8x8xf32> to vector<8x8x8xf32>
    %48 = arith.addf %45, %47 : vector<8x8x8xf32>
    %cst_15 = arith.constant dense<0xFF800000> : vector<8x8xf32>
    %49 = vector.multi_reduction <maximumf>, %48, %cst_15 [2] : vector<8x8x8xf32> to vector<8x8xf32>
    %50 = vector.shape_cast %49 : vector<8x8xf32> to vector<8x8x1xf32>
    %51 = vector.broadcast %50 : vector<8x8x1xf32> to vector<8x8x8xf32>
    %52 = arith.subf %48, %51 : vector<8x8x8xf32>
    %53 = math.exp %52 : vector<8x8x8xf32>
    %cst_16 = arith.constant dense<0.000000e+00> : vector<8x8xf32>
    %54 = vector.multi_reduction <add>, %53, %cst_16 [2] : vector<8x8x8xf32> to vector<8x8xf32>
    %55 = vector.shape_cast %54 : vector<8x8xf32> to vector<8x8x1xf32>
    %56 = vector.broadcast %55 : vector<8x8x1xf32> to vector<8x8x8xf32>
    %57 = arith.divf %53, %56 : vector<8x8x8xf32>
    %c0_17 = arith.constant 0 : index
    %c0_18 = arith.constant 0 : index
    %c0_19 = arith.constant 0 : index
    %c0_20 = arith.constant 0 : index
    %58 = vector.load %arg9[%c0_17, %c0_18, %c0_19, %c0_20] : memref<2x8x8x8xf32, #tpu.memory_space<vmem>>, vector<1x8x8x8xf32>
    %59 = vector.shape_cast %58 : vector<1x8x8x8xf32> to vector<8x8x8xf32>
    %60 = vector.shape_cast %57 : vector<8x8x8xf32> to vector<1x8x8x8xf32>
    tpu.vector_store %arg9[%c0_17, %c0_18, %c0_19, %c0_20], %60 {strides = array<i32>} : memref<2x8x8x8xf32, #tpu.memory_space<vmem>>, vector<1x8x8x8xf32>,
    "tpu.trace_start"() <{level = 10 : i32, message = "xqk,xkd->xqd"}> : () -> ()
    %cst_21 = arith.constant dense<0.000000e+00> : vector<8x8x8xf32>
    %61 = tpu.matmul %57, %44, %cst_21 {dimension_numbers = #tpu.dot_dimension_numbers<[2], [1], [1], [2], [0, 0, 0, 1, 1, 2], [0], [0]>} : vector<8x8x8xf32>, vector<8x8x8xf32>, vector<8x8x8xf32> -> vector<8x8x8xf32>
    "tpu.trace_stop"() : () -> ()
    %62 = vector.extract_strided_slice %61 {offsets = [0, 0, 0], sizes = [2, 8, 8], strides = [1, 1, 1]} : vector<8x8x8xf32> to vector<2x8x8xf32>
    %63 = vector.shape_cast %62 : vector<2x8x8xf32> to vector<16x8xf32>
    %64 = vector.extract_strided_slice %61 {offsets = [2, 0, 0], sizes = [2, 8, 8], strides = [1, 1, 1]} : vector<8x8x8xf32> to vector<2x8x8xf32>
    %65 = vector.shape_cast %64 : vector<2x8x8xf32> to vector<16x8xf32>
    %66 = vector.extract_strided_slice %61 {offsets = [4, 0, 0], sizes = [2, 8, 8], strides = [1, 1, 1]} : vector<8x8x8xf32> to vector<2x8x8xf32>
    %67 = vector.shape_cast %66 : vector<2x8x8xf32> to vector<16x8xf32>
    %68 = vector.extract_strided_slice %61 {offsets = [6, 0, 0], sizes = [2, 8, 8], strides = [1, 1, 1]} : vector<8x8x8xf32> to vector<2x8x8xf32>
    %69 = vector.shape_cast %68 : vector<2x8x8xf32> to vector<16x8xf32>
    %70 = tpu.concatenate %63, %65, %67, %69 in 1 : vector<16x8xf32>, vector<16x8xf32>, vector<16x8xf32>, vector<16x8xf32> -> vector<16x32xf32>
    %c0_22 = arith.constant 0 : index
    %c0_23 = arith.constant 0 : index
    %c0_24 = arith.constant 0 : index
    %71 = vector.load %arg5[%c0_22, %c0_23, %c0_24] : memref<2x32x32xf32, #tpu.memory_space<vmem>>, vector<1x32x32xf32>
    %72 = vector.shape_cast %71 : vector<1x32x32xf32> to vector<32x32xf32>
    %cst_25 = arith.constant dense<0.000000e+00> : vector<16x32xf32>
    %73 = tpu.matmul %70, %72, %cst_25 {dimension_numbers = #tpu.dot_dimension_numbers<[1], [0], [0], [1], [0, 0, 1, 1], [], []>} : vector<16x32xf32>, vector<32x32xf32>, vector<16x32xf32> -> vector<16x32xf32>
    %74 = arith.addf %0, %73 : vector<16x32xf32>
    %c2 = arith.constant 2 : index
    %c0_26 = arith.constant 0 : index
    %c0_27 = arith.constant 0 : index
    %75 = vector.load %arg3[%c2, %c0_26, %c0_27] : memref<5x1x32xf32, #tpu.memory_space<vmem>>, vector<1x1x32xf32>
    %76 = vector.shape_cast %75 : vector<1x1x32xf32> to vector<1x32xf32>
    %77 = arith.mulf %74, %74 : vector<16x32xf32>
    %cst_28 = arith.constant dense<0.000000e+00> : vector<16xf32>
    %78 = vector.multi_reduction <add>, %77, %cst_28 [1] : vector<16x32xf32> to vector<16xf32>
    %79 = vector.shape_cast %78 : vector<16xf32> to vector<16x1xf32>
    %cst_29 = arith.constant 3.200000e+01 : f32
    %80 = vector.broadcast %cst_29 : f32 to vector<16x1xf32>
    %81 = arith.divf %79, %80 : vector<16x1xf32>
    %cst_30 = arith.constant 9.99999997E-7 : f32
    %82 = vector.broadcast %cst_30 : f32 to vector<16x1xf32>
    %83 = arith.addf %81, %82 : vector<16x1xf32>
    %84 = math.rsqrt %83 : vector<16x1xf32>
    %85 = vector.broadcast %84 : vector<16x1xf32> to vector<16x32xf32>
    %86 = arith.mulf %74, %85 : vector<16x32xf32>
    %87 = vector.broadcast %76 : vector<1x32xf32> to vector<16x32xf32>
    %88 = arith.mulf %86, %87 : vector<16x32xf32>
    %c0_31 = arith.constant 0 : index
    %c0_32 = arith.constant 0 : index
    %c0_33 = arith.constant 0 : index
    %89 = vector.load %arg6[%c0_31, %c0_32, %c0_33] : memref<2x32x64xf32, #tpu.memory_space<vmem>>, vector<1x32x64xf32>
    %90 = vector.shape_cast %89 : vector<1x32x64xf32> to vector<32x64xf32>
    %cst_34 = arith.constant dense<0.000000e+00> : vector<16x64xf32>
    %91 = tpu.matmul %88, %90, %cst_34 {dimension_numbers = #tpu.dot_dimension_numbers<[1], [0], [0], [1], [0, 0, 1, 1], [], []>} : vector<16x32xf32>, vector<32x64xf32>, vector<16x64xf32> -> vector<16x64xf32>
    %cst_35 = arith.constant 0.000000e+00 : f32
    %92 = vector.broadcast %cst_35 : f32 to vector<16x64xf32>
    %93 = arith.maximumf %91, %92 : vector<16x64xf32>
    %c0_36 = arith.constant 0 : index
    %c0_37 = arith.constant 0 : index
    %c0_38 = arith.constant 0 : index
    %94 = vector.load %arg7[%c0_36, %c0_37, %c0_38] : memref<2x64x32xf32, #tpu.memory_space<vmem>>, vector<1x64x32xf32>
    %95 = vector.shape_cast %94 : vector<1x64x32xf32> to vector<64x32xf32>
    %cst_39 = arith.constant dense<0.000000e+00> : vector<16x32xf32>
    %96 = tpu.matmul %93, %95, %cst_39 {dimension_numbers = #tpu.dot_dimension_numbers<[1], [0], [0], [1], [0, 0, 1, 1], [], []>} : vector<16x64xf32>, vector<64x32xf32>, vector<16x32xf32> -> vector<16x32xf32>
    %97 = arith.addf %74, %96 : vector<16x32xf32>
    %c1 = arith.constant 1 : index
    %c0_40 = arith.constant 0 : index
    %c0_41 = arith.constant 0 : index
    %98 = vector.load %arg3[%c1, %c0_40, %c0_41] : memref<5x1x32xf32, #tpu.memory_space<vmem>>, vector<1x1x32xf32>
    %99 = vector.shape_cast %98 : vector<1x1x32xf32> to vector<1x32xf32>
    %100 = arith.mulf %97, %97 : vector<16x32xf32>
    %cst_42 = arith.constant dense<0.000000e+00> : vector<16xf32>
    %101 = vector.multi_reduction <add>, %100, %cst_42 [1] : vector<16x32xf32> to vector<16xf32>
    %102 = vector.shape_cast %101 : vector<16xf32> to vector<16x1xf32>
    %cst_43 = arith.constant 3.200000e+01 : f32
    %103 = vector.broadcast %cst_43 : f32 to vector<16x1xf32>
    %104 = arith.divf %102, %103 : vector<16x1xf32>
    %cst_44 = arith.constant 9.99999997E-7 : f32
    %105 = vector.broadcast %cst_44 : f32 to vector<16x1xf32>
    %106 = arith.addf %104, %105 : vector<16x1xf32>
    %107 = math.rsqrt %106 : vector<16x1xf32>
    %108 = vector.broadcast %107 : vector<16x1xf32> to vector<16x32xf32>
    %109 = arith.mulf %97, %108 : vector<16x32xf32>
    %110 = vector.broadcast %99 : vector<1x32xf32> to vector<16x32xf32>
    %111 = arith.mulf %109, %110 : vector<16x32xf32>
    %c1_45 = arith.constant 1 : index
    %c0_46 = arith.constant 0 : index
    %c0_47 = arith.constant 0 : index
    %112 = vector.load %arg4[%c1_45, %c0_46, %c0_47] : memref<2x32x96xf32, #tpu.memory_space<vmem>>, vector<1x32x96xf32>
    %113 = vector.shape_cast %112 : vector<1x32x96xf32> to vector<32x96xf32>
    %cst_48 = arith.constant dense<0.000000e+00> : vector<16x96xf32>
    %114 = tpu.matmul %111, %113, %cst_48 {dimension_numbers = #tpu.dot_dimension_numbers<[1], [0], [0], [1], [0, 0, 1, 1], [], []>} : vector<16x32xf32>, vector<32x96xf32>, vector<16x96xf32> -> vector<16x96xf32>
    %115 = vector.extract_strided_slice %114 {offsets = [0, 0], sizes = [16, 8], strides = [1, 1]} : vector<16x96xf32> to vector<16x8xf32>
    %116 = vector.shape_cast %115 : vector<16x8xf32> to vector<2x8x8xf32>
    %117 = vector.extract_strided_slice %114 {offsets = [0, 8], sizes = [16, 8], strides = [1, 1]} : vector<16x96xf32> to vector<16x8xf32>
    %118 = vector.shape_cast %117 : vector<16x8xf32> to vector<2x8x8xf32>
    %119 = vector.extract_strided_slice %114 {offsets = [0, 16], sizes = [16, 8], strides = [1, 1]} : vector<16x96xf32> to vector<16x8xf32>
    %120 = vector.shape_cast %119 : vector<16x8xf32> to vector<2x8x8xf32>
    %121 = vector.extract_strided_slice %114 {offsets = [0, 24], sizes = [16, 8], strides = [1, 1]} : vector<16x96xf32> to vector<16x8xf32>
    %122 = vector.shape_cast %121 : vector<16x8xf32> to vector<2x8x8xf32>
    %123 = tpu.concatenate %116, %118, %120, %122 in 0 : vector<2x8x8xf32>, vector<2x8x8xf32>, vector<2x8x8xf32>, vector<2x8x8xf32> -> vector<8x8x8xf32>
    %124 = vector.extract_strided_slice %114 {offsets = [0, 32], sizes = [16, 8], strides = [1, 1]} : vector<16x96xf32> to vector<16x8xf32>
    %125 = vector.shape_cast %124 : vector<16x8xf32> to vector<2x8x8xf32>
    %126 = vector.extract_strided_slice %114 {offsets = [0, 40], sizes = [16, 8], strides = [1, 1]} : vector<16x96xf32> to vector<16x8xf32>
    %127 = vector.shape_cast %126 : vector<16x8xf32> to vector<2x8x8xf32>
    %128 = vector.extract_strided_slice %114 {offsets = [0, 48], sizes = [16, 8], strides = [1, 1]} : vector<16x96xf32> to vector<16x8xf32>
    %129 = vector.shape_cast %128 : vector<16x8xf32> to vector<2x8x8xf32>
    %130 = vector.extract_strided_slice %114 {offsets = [0, 56], sizes = [16, 8], strides = [1, 1]} : vector<16x96xf32> to vector<16x8xf32>
    %131 = vector.shape_cast %130 : vector<16x8xf32> to vector<2x8x8xf32>
    %132 = tpu.concatenate %125, %127, %129, %131 in 0 : vector<2x8x8xf32>, vector<2x8x8xf32>, vector<2x8x8xf32>, vector<2x8x8xf32> -> vector<8x8x8xf32>
    %133 = vector.extract_strided_slice %114 {offsets = [0, 64], sizes = [16, 8], strides = [1, 1]} : vector<16x96xf32> to vector<16x8xf32>
    %134 = vector.shape_cast %133 : vector<16x8xf32> to vector<2x8x8xf32>
    %135 = vector.extract_strided_slice %114 {offsets = [0, 72], sizes = [16, 8], strides = [1, 1]} : vector<16x96xf32> to vector<16x8xf32>
    %136 = vector.shape_cast %135 : vector<16x8xf32> to vector<2x8x8xf32>
    %137 = vector.extract_strided_slice %114 {offsets = [0, 80], sizes = [16, 8], strides = [1, 1]} : vector<16x96xf32> to vector<16x8xf32>
    %138 = vector.shape_cast %137 : vector<16x8xf32> to vector<2x8x8xf32>
    %139 = vector.extract_strided_slice %114 {offsets = [0, 88], sizes = [16, 8], strides = [1, 1]} : vector<16x96xf32> to vector<16x8xf32>
    %140 = vector.shape_cast %139 : vector<16x8xf32> to vector<2x8x8xf32>
    %141 = tpu.concatenate %134, %136, %138, %140 in 0 : vector<2x8x8xf32>, vector<2x8x8xf32>, vector<2x8x8xf32>, vector<2x8x8xf32> -> vector<8x8x8xf32>
    "tpu.trace_start"() <{level = 10 : i32, message = "xqd,xkd->xqk"}> : () -> ()
    %cst_49 = arith.constant dense<0.000000e+00> : vector<8x8x8xf32>
    %142 = tpu.matmul %123, %132, %cst_49 {dimension_numbers = #tpu.dot_dimension_numbers<[2], [2], [1], [1], [0, 0, 0, 1, 1, 1], [0], [0]>} : vector<8x8x8xf32>, vector<8x8x8xf32>, vector<8x8x8xf32> -> vector<8x8x8xf32>
    "tpu.trace_stop"() : () -> ()
    %c1_50 = arith.constant 1 : index
    %c0_51 = arith.constant 0 : index
    %c0_52 = arith.constant 0 : index
    %c0_53 = arith.constant 0 : index
    %143 = vector.load %arg2[%c1_50, %c0_51, %c0_52, %c0_53] : memref<2x8x8x8xf32, #tpu.memory_space<vmem>>, vector<1x8x8x8xf32>
    %144 = vector.shape_cast %143 : vector<1x8x8x8xf32> to vector<8x8x8xf32>
    %145 = arith.addf %142, %144 : vector<8x8x8xf32>
    %cst_54 = arith.constant dense<0xFF800000> : vector<8x8xf32>
    %146 = vector.multi_reduction <maximumf>, %145, %cst_54 [2] : vector<8x8x8xf32> to vector<8x8xf32>
    %147 = vector.shape_cast %146 : vector<8x8xf32> to vector<8x8x1xf32>
    %148 = vector.broadcast %147 : vector<8x8x1xf32> to vector<8x8x8xf32>
    %149 = arith.subf %145, %148 : vector<8x8x8xf32>
    %150 = math.exp %149 : vector<8x8x8xf32>
    %cst_55 = arith.constant dense<0.000000e+00> : vector<8x8xf32>
    %151 = vector.multi_reduction <add>, %150, %cst_55 [2] : vector<8x8x8xf32> to vector<8x8xf32>
    %152 = vector.shape_cast %151 : vector<8x8xf32> to vector<8x8x1xf32>
    %153 = vector.broadcast %152 : vector<8x8x1xf32> to vector<8x8x8xf32>
    %154 = arith.divf %150, %153 : vector<8x8x8xf32>
    %c1_56 = arith.constant 1 : index
    %c0_57 = arith.constant 0 : index
    %c0_58 = arith.constant 0 : index
    %c0_59 = arith.constant 0 : index
    %155 = vector.load %arg9[%c1_56, %c0_57, %c0_58, %c0_59] : memref<2x8x8x8xf32, #tpu.memory_space<vmem>>, vector<1x8x8x8xf32>
    %156 = vector.shape_cast %155 : vector<1x8x8x8xf32> to vector<8x8x8xf32>
    %157 = vector.shape_cast %154 : vector<8x8x8xf32> to vector<1x8x8x8xf32>
    tpu.vector_store %arg9[%c1_56, %c0_57, %c0_58, %c0_59], %157 {strides = array<i32>} : memref<2x8x8x8xf32, #tpu.memory_space<vmem>>, vector<1x8x8x8xf32>,
    "tpu.trace_start"() <{level = 10 : i32, message = "xqk,xkd->xqd"}> : () -> ()
    %cst_60 = arith.constant dense<0.000000e+00> : vector<8x8x8xf32>
    %158 = tpu.matmul %154, %141, %cst_60 {dimension_numbers = #tpu.dot_dimension_numbers<[2], [1], [1], [2], [0, 0, 0, 1, 1, 2], [0], [0]>} : vector<8x8x8xf32>, vector<8x8x8xf32>, vector<8x8x8xf32> -> vector<8x8x8xf32>
    "tpu.trace_stop"() : () -> ()
    %159 = vector.extract_strided_slice %158 {offsets = [0, 0, 0], sizes = [2, 8, 8], strides = [1, 1, 1]} : vector<8x8x8xf32> to vector<2x8x8xf32>
    %160 = vector.shape_cast %159 : vector<2x8x8xf32> to vector<16x8xf32>
    %161 = vector.extract_strided_slice %158 {offsets = [2, 0, 0], sizes = [2, 8, 8], strides = [1, 1, 1]} : vector<8x8x8xf32> to vector<2x8x8xf32>
    %162 = vector.shape_cast %161 : vector<2x8x8xf32> to vector<16x8xf32>
    %163 = vector.extract_strided_slice %158 {offsets = [4, 0, 0], sizes = [2, 8, 8], strides = [1, 1, 1]} : vector<8x8x8xf32> to vector<2x8x8xf32>
    %164 = vector.shape_cast %163 : vector<2x8x8xf32> to vector<16x8xf32>
    %165 = vector.extract_strided_slice %158 {offsets = [6, 0, 0], sizes = [2, 8, 8], strides = [1, 1, 1]} : vector<8x8x8xf32> to vector<2x8x8xf32>
    %166 = vector.shape_cast %165 : vector<2x8x8xf32> to vector<16x8xf32>
    %167 = tpu.concatenate %160, %162, %164, %166 in 1 : vector<16x8xf32>, vector<16x8xf32>, vector<16x8xf32>, vector<16x8xf32> -> vector<16x32xf32>
    %c1_61 = arith.constant 1 : index
    %c0_62 = arith.constant 0 : index
    %c0_63 = arith.constant 0 : index
    %168 = vector.load %arg5[%c1_61, %c0_62, %c0_63] : memref<2x32x32xf32, #tpu.memory_space<vmem>>, vector<1x32x32xf32>
    %169 = vector.shape_cast %168 : vector<1x32x32xf32> to vector<32x32xf32>
    %cst_64 = arith.constant dense<0.000000e+00> : vector<16x32xf32>
    %170 = tpu.matmul %167, %169, %cst_64 {dimension_numbers = #tpu.dot_dimension_numbers<[1], [0], [0], [1], [0, 0, 1, 1], [], []>} : vector<16x32xf32>, vector<32x32xf32>, vector<16x32xf32> -> vector<16x32xf32>
    %171 = arith.addf %97, %170 : vector<16x32xf32>
    %c3 = arith.constant 3 : index
    %c0_65 = arith.constant 0 : index
    %c0_66 = arith.constant 0 : index
    %172 = vector.load %arg3[%c3, %c0_65, %c0_66] : memref<5x1x32xf32, #tpu.memory_space<vmem>>, vector<1x1x32xf32>
    %173 = vector.shape_cast %172 : vector<1x1x32xf32> to vector<1x32xf32>
    %174 = arith.mulf %171, %171 : vector<16x32xf32>
    %cst_67 = arith.constant dense<0.000000e+00> : vector<16xf32>
    %175 = vector.multi_reduction <add>, %174, %cst_67 [1] : vector<16x32xf32> to vector<16xf32>
    %176 = vector.shape_cast %175 : vector<16xf32> to vector<16x1xf32>
    %cst_68 = arith.constant 3.200000e+01 : f32
    %177 = vector.broadcast %cst_68 : f32 to vector<16x1xf32>
    %178 = arith.divf %176, %177 : vector<16x1xf32>
    %cst_69 = arith.constant 9.99999997E-7 : f32
    %179 = vector.broadcast %cst_69 : f32 to vector<16x1xf32>
    %180 = arith.addf %178, %179 : vector<16x1xf32>
    %181 = math.rsqrt %180 : vector<16x1xf32>
    %182 = vector.broadcast %181 : vector<16x1xf32> to vector<16x32xf32>
    %183 = arith.mulf %171, %182 : vector<16x32xf32>
    %184 = vector.broadcast %173 : vector<1x32xf32> to vector<16x32xf32>
    %185 = arith.mulf %183, %184 : vector<16x32xf32>
    %c1_70 = arith.constant 1 : index
    %c0_71 = arith.constant 0 : index
    %c0_72 = arith.constant 0 : index
    %186 = vector.load %arg6[%c1_70, %c0_71, %c0_72] : memref<2x32x64xf32, #tpu.memory_space<vmem>>, vector<1x32x64xf32>
    %187 = vector.shape_cast %186 : vector<1x32x64xf32> to vector<32x64xf32>
    %cst_73 = arith.constant dense<0.000000e+00> : vector<16x64xf32>
    %188 = tpu.matmul %185, %187, %cst_73 {dimension_numbers = #tpu.dot_dimension_numbers<[1], [0], [0], [1], [0, 0, 1, 1], [], []>} : vector<16x32xf32>, vector<32x64xf32>, vector<16x64xf32> -> vector<16x64xf32>
    %cst_74 = arith.constant 0.000000e+00 : f32
    %189 = vector.broadcast %cst_74 : f32 to vector<16x64xf32>
    %190 = arith.maximumf %188, %189 : vector<16x64xf32>
    %c1_75 = arith.constant 1 : index
    %c0_76 = arith.constant 0 : index
    %c0_77 = arith.constant 0 : index
    %191 = vector.load %arg7[%c1_75, %c0_76, %c0_77] : memref<2x64x32xf32, #tpu.memory_space<vmem>>, vector<1x64x32xf32>
    %192 = vector.shape_cast %191 : vector<1x64x32xf32> to vector<64x32xf32>
    %cst_78 = arith.constant dense<0.000000e+00> : vector<16x32xf32>
    %193 = tpu.matmul %190, %192, %cst_78 {dimension_numbers = #tpu.dot_dimension_numbers<[1], [0], [0], [1], [0, 0, 1, 1], [], []>} : vector<16x64xf32>, vector<64x32xf32>, vector<16x32xf32> -> vector<16x32xf32>
    %194 = arith.addf %171, %193 : vector<16x32xf32>
    %c4 = arith.constant 4 : index
    %c0_79 = arith.constant 0 : index
    %c0_80 = arith.constant 0 : index
    %195 = vector.load %arg3[%c4, %c0_79, %c0_80] : memref<5x1x32xf32, #tpu.memory_space<vmem>>, vector<1x1x32xf32>
    %196 = vector.shape_cast %195 : vector<1x1x32xf32> to vector<1x32xf32>
    %197 = arith.mulf %194, %194 : vector<16x32xf32>
    %cst_81 = arith.constant dense<0.000000e+00> : vector<16xf32>
    %198 = vector.multi_reduction <add>, %197, %cst_81 [1] : vector<16x32xf32> to vector<16xf32>
    %199 = vector.shape_cast %198 : vector<16xf32> to vector<16x1xf32>
    %cst_82 = arith.constant 3.200000e+01 : f32
    %200 = vector.broadcast %cst_82 : f32 to vector<16x1xf32>
    %201 = arith.divf %199, %200 : vector<16x1xf32>
    %cst_83 = arith.constant 9.99999997E-7 : f32
    %202 = vector.broadcast %cst_83 : f32 to vector<16x1xf32>
    %203 = arith.addf %201, %202 : vector<16x1xf32>
    %204 = math.rsqrt %203 : vector<16x1xf32>
    %205 = vector.broadcast %204 : vector<16x1xf32> to vector<16x32xf32>
    %206 = arith.mulf %194, %205 : vector<16x32xf32>
    %207 = vector.broadcast %196 : vector<1x32xf32> to vector<16x32xf32>
    %208 = arith.mulf %206, %207 : vector<16x32xf32>
    %c0_84 = arith.constant 0 : index
    %c0_85 = arith.constant 0 : index
    %209 = vector.load %arg8[%c0_84, %c0_85] : memref<16x32xf32, #tpu.memory_space<vmem>>, vector<16x32xf32>
    tpu.vector_store %arg8[%c0_84, %c0_85], %208 {strides = array<i32>} : memref<16x32xf32, #tpu.memory_space<vmem>>, vector<16x32xf32>,
    return
  }
  func.func @transform_0(%arg0: i32) -> (i32, i32) {
    %c0_i32 = arith.constant 0 : i32
    %c0_i32_0 = arith.constant 0 : i32
    %c0_i32_1 = arith.constant 0 : i32
    return %c0_i32, %c0_i32_0 : i32, i32
  }
  func.func @transform_1(%arg0: i32) -> (i32, i32, i32, i32) {
    %c0_i32 = arith.constant 0 : i32
    %c0_i32_0 = arith.constant 0 : i32
    %c0_i32_1 = arith.constant 0 : i32
    %c0_i32_2 = arith.constant 0 : i32
    %c0_i32_3 = arith.constant 0 : i32
    return %c0_i32, %c0_i32_0, %c0_i32_1, %c0_i32_2 : i32, i32, i32, i32
  }
  func.func @transform_2(%arg0: i32) -> (i32, i32, i32) {
    %c0_i32 = arith.constant 0 : i32
    %c0_i32_0 = arith.constant 0 : i32
    %c0_i32_1 = arith.constant 0 : i32
    %c0_i32_2 = arith.constant 0 : i32
    return %c0_i32, %c0_i32_0, %c0_i32_1 : i32, i32, i32
  }
  func.func @transform_3(%arg0: i32) -> (i32, i32, i32) {
    %c0_i32 = arith.constant 0 : i32
    %c0_i32_0 = arith.constant 0 : i32
    %c0_i32_1 = arith.constant 0 : i32
    %c0_i32_2 = arith.constant 0 : i32
    return %c0_i32, %c0_i32_0, %c0_i32_1 : i32, i32, i32
  }
  func.func @transform_4(%arg0: i32) -> (i32, i32, i32) {
    %c0_i32 = arith.constant 0 : i32
    %c0_i32_0 = arith.constant 0 : i32
    %c0_i32_1 = arith.constant 0 : i32
    %c0_i32_2 = arith.constant 0 : i32
    return %c0_i32, %c0_i32_0, %c0_i32_1 : i32, i32, i32
  }
  func.func @transform_5(%arg0: i32) -> (i32, i32, i32) {
    %c0_i32 = arith.constant 0 : i32
    %c0_i32_0 = arith.constant 0 : i32
    %c0_i32_1 = arith.constant 0 : i32
    %c0_i32_2 = arith.constant 0 : i32
    return %c0_i32, %c0_i32_0, %c0_i32_1 : i32, i32, i32
  }
  func.func @transform_6(%arg0: i32) -> (i32, i32, i32) {
    %c0_i32 = arith.constant 0 : i32
    %c0_i32_0 = arith.constant 0 : i32
    %c0_i32_1 = arith.constant 0 : i32
    %c0_i32_2 = arith.constant 0 : i32
    return %c0_i32, %c0_i32_0, %c0_i32_1 : i32, i32, i32
  }
  func.func @transform_7(%arg0: i32) -> (i32, i32) {
    %c0_i32 = arith.constant 0 : i32
    %c0_i32_0 = arith.constant 0 : i32
    %c0_i32_1 = arith.constant 0 : i32
    return %c0_i32, %c0_i32_0 : i32, i32
  }
  func.func @transform_8(%arg0: i32) -> (i32, i32, i32, i32) {
    %c0_i32 = arith.constant 0 : i32
    %c0_i32_0 = arith.constant 0 : i32
    %c0_i32_1 = arith.constant 0 : i32
    %c0_i32_2 = arith.constant 0 : i32
    %c0_i32_3 = arith.constant 0 : i32
    return %c0_i32, %c0_i32_0, %c0_i32_1, %c0_i32_2 : i32, i32, i32, i32
  }
}

</mosaic_0001>

<llo_original>
// kernel: t5_encoder.1
$region0: #{t5_encoder.1}
  #allocation0 [shape = 'u32[]', space=smem, size = 0x4, offset = 0x4, fixed_abs, tag = 'smem constant byte address 0x4 - core index']
  #allocation1 [shape = 'u32[72,128]{1,0:T(1,128)}', space=vmem, size = 0x9000, scoped, tag = 'internal scratch']
  %s0 = inlined_call_operand.vmem [shape: f32[16,32], index: 0, kind: input, shape index: {}]
  %s1 = inlined_call_operand.vmem [shape: f32[2,8,8,8], index: 1, kind: input, shape index: {}]
  %s2 = inlined_call_operand.vmem [shape: f32[5,1,32], index: 2, kind: input, shape index: {}]
  %s3 = inlined_call_operand.vmem [shape: f32[2,32,96], index: 3, kind: input, shape index: {}]
  %s4 = inlined_call_operand.vmem [shape: f32[2,32,32], index: 4, kind: input, shape index: {}]
  %s5 = inlined_call_operand.vmem [shape: f32[2,32,64], index: 5, kind: input, shape index: {}]
  %s6 = inlined_call_operand.vmem [shape: f32[2,64,32], index: 6, kind: input, shape index: {}]
  %s7 = inlined_call_operand.hbm [shape: f32[16,32], index: 7, kind: output, shape index: {0}]
  %s8 = inlined_call_operand.vmem [shape: f32[2,8,8,8], index: 8, kind: output, shape index: {1}]
  %9 = xla_tuple %s7, %s8
  %s10 = sld [smem:[#allocation0]]
  $region46: #{t5_encoder.1} parent=0
    _
  %s12 = ssub.s32 1, %s10
  %s13 = scalar_select 0, %s12, %s10
  $region1: #{t5_encoder.1} parent=0
    #allocation2 [shape = 'u8[8192]{0}', space=vmem, size = 0x2000, scoped, tag = 'output window, operand 0, single buffered']
    #allocation3 [shape = 's32[1]{0}', space=sflag, size = 0x4, scoped, tag = 'scoped memory for t5_encoder.1']
    %14 = vsyncpa [#allocation3], 0
    // Predicated region
    $region2: #{t5_encoder.1} parent=1 // pred_check
      _
    $region3: #{t5_encoder.1} parent=1 // pred_check_branch
      %16 = sbr.rel (0) target = $region5
    $region4: #{t5_encoder.1} parent=1 // pred_region
      _
    $region5: #{t5_encoder.1} parent=1 // pred_fallthru
      _
    // Predicated region
    $region6: #{t5_encoder.1} parent=1 // pred_check
      _
    $region7: #{t5_encoder.1} parent=1 // pred_check_branch
      %18 = sbr.rel (0) target = $region9
    $region8: #{t5_encoder.1} parent=1 // pred_region
      _
    $region9: #{t5_encoder.1} parent=1 // pred_fallthru
      _
    // Predicated region
    $region10: #{t5_encoder.1} parent=1 // pred_check
      _
    $region11: #{t5_encoder.1} parent=1 // pred_check_branch
      %20 = sbr.rel (0) target = $region13
    $region12: #{t5_encoder.1} parent=1 // pred_region
      _
    $region13: #{t5_encoder.1} parent=1 // pred_fallthru
      _
    // Predicated region
    $region14: #{t5_encoder.1} parent=1 // pred_check
      _
    $region15: #{t5_encoder.1} parent=1 // pred_check_branch
      %22 = sbr.rel (0) target = $region17
    $region16: #{t5_encoder.1} parent=1 // pred_region
      _
    $region17: #{t5_encoder.1} parent=1 // pred_fallthru
      _
    // Predicated region
    $region18: #{t5_encoder.1} parent=1 // pred_check
      _
    $region19: #{t5_encoder.1} parent=1 // pred_check_branch
      %24 = sbr.rel (0) target = $region21
    $region20: #{t5_encoder.1} parent=1 // pred_region
      _
    $region21: #{t5_encoder.1} parent=1 // pred_fallthru
      _
    // Predicated region
    $region22: #{t5_encoder.1} parent=1 // pred_check
      _
    $region23: #{t5_encoder.1} parent=1 // pred_check_branch
      %26 = sbr.rel (0) target = $region25
    $region24: #{t5_encoder.1} parent=1 // pred_region
      _
    $region25: #{t5_encoder.1} parent=1 // pred_fallthru
      _
    // Predicated region
    $region26: #{t5_encoder.1} parent=1 // pred_check
      _
    $region27: #{t5_encoder.1} parent=1 // pred_check_branch
      %28 = sbr.rel (0) target = $region29
    $region28: #{t5_encoder.1} parent=1 // pred_region
      _
    $region29: #{t5_encoder.1} parent=1 // pred_fallthru
      _
    %v29 = vld [vmem:[%s0] sm:$0xff]
    %v30 = vld [vmem:[%s0 + $0x8] sm:$0xff]
    %v31 = vld [vmem:[%s2] sm:$0x1]
    %v32 = vmul.f32 %v29, %v29
    %v33 = vmul.f32 %v30, %v30
    %vm34 = vcmask 261120
    %v35 = vsel %vm34, %v32, 0.0
    %36 = vadd.xlane.f32.xlu0 %v35
    %v37 = vpop.xlane.xlu0 %36
    %v38 = vsel %vm34, %v33, 0.0
    %39 = vadd.xlane.f32.xlu0 %v38
    %v40 = vpop.xlane.xlu0 %39
    %v41 = vrcp.pop 32.0
    %v42 = vmul.f32 32.0, %v41
    %v43 = vsub.f32 1.0, %v42
    %v44 = vmul.f32 %v41, %v43
    %v45 = vadd.f32 %v41, %v44
    %vm46 = vweird.f32 %v41
    %v47 = vsel %vm46, %v41, %v45
    %v48 = vmul.f32 %v37, %v47
    %v49 = vmul.f32 %v40, %v47
    %v50 = vadd.f32 %v48, 1e-06
    %v51 = vadd.f32 %v49, 1e-06
    %v52 = vrsqrt.pop %v50
    %v53 = vmul.f32 %v52, %v50
    %v54 = vmul.f32 %v53, %v52
    %v55 = vmul.f32 0.5, %v54
    %v56 = vsub.f32 1.5, %v55
    %v57 = vmul.f32 %v52, %v56
    %vm58 = vweird.f32 %v50
    %vm59 = vweird.f32 %v52
    %vm60 = vmor %vm58, %vm59
    %v61 = vsel %vm60, %v52, %v57
    %v62 = vrsqrt.pop %v51
    %v63 = vmul.f32 %v62, %v51
    %v64 = vmul.f32 %v63, %v62
    %v65 = vmul.f32 0.5, %v64
    %v66 = vsub.f32 1.5, %v65
    %v67 = vmul.f32 %v62, %v66
    %vm68 = vweird.f32 %v51
    %vm69 = vweird.f32 %v62
    %vm70 = vmor %vm68, %vm69
    %v71 = vsel %vm70, %v62, %v67
    %v72 = vmul.f32 %v29, %v61
    %v73 = vmul.f32 %v30, %v71
    %v75 = vperm.slane %v31, 0
    %v77 = vmul.f32 %v72, %v75
    %v78 = vmul.f32 %v73, %v75
    %v79 = vld [vmem:[%s3] sm:$0xff]
    %v80 = vld [vmem:[%s3 + $0x8] sm:$0xff]
    %v81 = vld [vmem:[%s3 + $0x10] sm:$0xff]
    %v82 = vld [vmem:[%s3 + $0x18] sm:$0xff]
    %v84 = vsel %vm34, %v77, 0
    %v87 = vsel %vm34, %v78, 0
    %89 = vmatpush.msra.mxu0 0.0
    %90 = vmatpush.msra.mxu0 0.0
    %91 = vmatpush.msra.mxu0 0.0
    %92 = vmatpush.msra.mxu0 0.0
    %93 = vmatpush.msra.mxu0 0.0
    %94 = vmatpush.msra.mxu0 0.0
    %95 = vmatpush.msra.mxu0 0.0
    %96 = vmatpush.msra.mxu0 0.0
    %97 = vmatpush.msra.mxu0 0.0
    %98 = vmatpush.msra.mxu0 0.0
    %99 = vmatpush.msra.mxu0 0.0
    %100 = vmatpush.msra.mxu0 0.0
    %101 = vmatpush.msra.mxu0 %v82
    %102 = vmatpush.msra.mxu0 %v81
    %103 = vmatpush.msra.mxu0 %v80
    %104 = vmatpush.msra.mxu0 %v79
    %105 = vmatmul.f32.gmra.mxu0 %v84
    %v106 = vpop.f32.mrf.mxu0
    %v107 = vadd.f32 0.0, %v106
    %108 = vmatmul.f32.gmra.mxu0 %v87
    %v109 = vpop.f32.mrf.mxu0
    %v110 = vadd.f32 0.0, %v109
    %111 = vdwg.mxu0
    %114 = vrot.lane.b32.xlu0 %v107, 120
    %v115 = vpop.permute.xlu0 %114
    %116 = vrot.lane.b32.xlu0 %v110, 120
    %v117 = vpop.permute.xlu0 %116
    %118 = vrot.lane.b32.xlu0 %v107, 112
    %v119 = vpop.permute.xlu0 %118
    %120 = vrot.lane.b32.xlu0 %v110, 112
    %v121 = vpop.permute.xlu0 %120
    %122 = vrot.lane.b32.xlu0 %v107, 104
    %v123 = vpop.permute.xlu0 %122
    %124 = vrot.lane.b32.xlu0 %v110, 104
    %v125 = vpop.permute.xlu0 %124
    %v126 = vld [vmem:[%s1] sm:$0xff]
    %v127 = vld [vmem:[%s1 + $0x8] sm:$0xff]
    %v128 = vld [vmem:[%s1 + $0x10] sm:$0xff]
    %v129 = vld [vmem:[%s1 + $0x18] sm:$0xff]
    %v130 = vld [vmem:[%s1 + $0x20] sm:$0xff]
    %v131 = vld [vmem:[%s1 + $0x28] sm:$0xff]
    %v132 = vld [vmem:[%s1 + $0x30] sm:$0xff]
    %v133 = vld [vmem:[%s1 + $0x38] sm:$0xff]
    %134 = vrot.lane.b32.xlu0 %v107, 96
    %v135 = vpop.permute.xlu0 %134
    %vm136 = vcmask 64512
    %v137 = vsel %vm136, %v107, 0
    %v139 = vsel %vm136, %v135, 0
    %141 = vmatpush.xpose.msra.mxu0 0.0
    %142 = vmatpush.xpose.msra.mxu0 0.0
    %143 = vmatpush.xpose.msra.mxu0 0.0
    %144 = vmatpush.xpose.msra.mxu0 0.0
    %145 = vmatpush.xpose.msra.mxu0 0.0
    %146 = vmatpush.xpose.msra.mxu0 0.0
    %147 = vmatpush.xpose.msra.mxu0 0.0
    %148 = vmatpush.xpose.msra.mxu0 0.0
    %149 = vmatpush.xpose.msra.mxu0 0.0
    %150 = vmatpush.xpose.msra.mxu0 0.0
    %151 = vmatpush.xpose.msra.mxu0 0.0
    %152 = vmatpush.xpose.msra.mxu0 0.0
    %153 = vmatpush.xpose.msra.mxu0 0.0
    %154 = vmatpush.xpose.msra.mxu0 0.0
    %155 = vmatpush.xpose.msra.mxu0 0.0
    %156 = vmatpush.xpose.msra.mxu0 %v139
    %157 = vmatmul.f32.gmra.mxu0 %v137
    %v158 = vpop.f32.mrf.mxu0
    %v159 = vadd.f32 %v126, %v158
    %160 = vdwg.mxu0
    %161 = vrot.lane.b32.xlu0 %v110, 96
    %v162 = vpop.permute.xlu0 %161
    %v163 = vsel %vm136, %v110, 0
    %v165 = vsel %vm136, %v162, 0
    %167 = vmatpush.xpose.msra.mxu0 0.0
    %168 = vmatpush.xpose.msra.mxu0 0.0
    %169 = vmatpush.xpose.msra.mxu0 0.0
    %170 = vmatpush.xpose.msra.mxu0 0.0
    %171 = vmatpush.xpose.msra.mxu0 0.0
    %172 = vmatpush.xpose.msra.mxu0 0.0
    %173 = vmatpush.xpose.msra.mxu0 0.0
    %174 = vmatpush.xpose.msra.mxu0 0.0
    %175 = vmatpush.xpose.msra.mxu0 0.0
    %176 = vmatpush.xpose.msra.mxu0 0.0
    %177 = vmatpush.xpose.msra.mxu0 0.0
    %178 = vmatpush.xpose.msra.mxu0 0.0
    %179 = vmatpush.xpose.msra.mxu0 0.0
    %180 = vmatpush.xpose.msra.mxu0 0.0
    %181 = vmatpush.xpose.msra.mxu0 0.0
    %182 = vmatpush.xpose.msra.mxu0 %v165
    %183 = vmatmul.f32.gmra.mxu0 %v163
    %v184 = vpop.f32.mrf.mxu0
    %v185 = vadd.f32 %v127, %v184
    %186 = vdwg.mxu0
    %187 = vrot.lane.b32.xlu0 %v115, 96
    %v188 = vpop.permute.xlu0 %187
    %v189 = vsel %vm136, %v115, 0
    %v191 = vsel %vm136, %v188, 0
    %193 = vmatpush.xpose.msra.mxu0 0.0
    %194 = vmatpush.xpose.msra.mxu0 0.0
    %195 = vmatpush.xpose.msra.mxu0 0.0
    %196 = vmatpush.xpose.msra.mxu0 0.0
    %197 = vmatpush.xpose.msra.mxu0 0.0
    %198 = vmatpush.xpose.msra.mxu0 0.0
    %199 = vmatpush.xpose.msra.mxu0 0.0
    %200 = vmatpush.xpose.msra.mxu0 0.0
    %201 = vmatpush.xpose.msra.mxu0 0.0
    %202 = vmatpush.xpose.msra.mxu0 0.0
    %203 = vmatpush.xpose.msra.mxu0 0.0
    %204 = vmatpush.xpose.msra.mxu0 0.0
    %205 = vmatpush.xpose.msra.mxu0 0.0
    %206 = vmatpush.xpose.msra.mxu0 0.0
    %207 = vmatpush.xpose.msra.mxu0 0.0
    %208 = vmatpush.xpose.msra.mxu0 %v191
    %209 = vmatmul.f32.gmra.mxu0 %v189
    %v210 = vpop.f32.mrf.mxu0
    %v211 = vadd.f32 %v128, %v210
    %212 = vdwg.mxu0
    %213 = vrot.lane.b32.xlu0 %v117, 96
    %v214 = vpop.permute.xlu0 %213
    %v215 = vsel %vm136, %v117, 0
    %v217 = vsel %vm136, %v214, 0
    %219 = vmatpush.xpose.msra.mxu0 0.0
    %220 = vmatpush.xpose.msra.mxu0 0.0
    %221 = vmatpush.xpose.msra.mxu0 0.0
    %222 = vmatpush.xpose.msra.mxu0 0.0
    %223 = vmatpush.xpose.msra.mxu0 0.0
    %224 = vmatpush.xpose.msra.mxu0 0.0
    %225 = vmatpush.xpose.msra.mxu0 0.0
    %226 = vmatpush.xpose.msra.mxu0 0.0
    %227 = vmatpush.xpose.msra.mxu0 0.0
    %228 = vmatpush.xpose.msra.mxu0 0.0
    %229 = vmatpush.xpose.msra.mxu0 0.0
    %230 = vmatpush.xpose.msra.mxu0 0.0
    %231 = vmatpush.xpose.msra.mxu0 0.0
    %232 = vmatpush.xpose.msra.mxu0 0.0
    %233 = vmatpush.xpose.msra.mxu0 0.0
    %234 = vmatpush.xpose.msra.mxu0 %v217
    %235 = vmatmul.f32.gmra.mxu0 %v215
    %v236 = vpop.f32.mrf.mxu0
    %v237 = vadd.f32 %v129, %v236
    %238 = vdwg.mxu0
    %239 = vrot.lane.b32.xlu0 %v119, 96
    %v240 = vpop.permute.xlu0 %239
    %v241 = vsel %vm136, %v119, 0
    %v243 = vsel %vm136, %v240, 0
    %245 = vmatpush.xpose.msra.mxu0 0.0
    %246 = vmatpush.xpose.msra.mxu0 0.0
    %247 = vmatpush.xpose.msra.mxu0 0.0
    %248 = vmatpush.xpose.msra.mxu0 0.0
    %249 = vmatpush.xpose.msra.mxu0 0.0
    %250 = vmatpush.xpose.msra.mxu0 0.0
    %251 = vmatpush.xpose.msra.mxu0 0.0
    %252 = vmatpush.xpose.msra.mxu0 0.0
    %253 = vmatpush.xpose.msra.mxu0 0.0
    %254 = vmatpush.xpose.msra.mxu0 0.0
    %255 = vmatpush.xpose.msra.mxu0 0.0
    %256 = vmatpush.xpose.msra.mxu0 0.0
    %257 = vmatpush.xpose.msra.mxu0 0.0
    %258 = vmatpush.xpose.msra.mxu0 0.0
    %259 = vmatpush.xpose.msra.mxu0 0.0
    %260 = vmatpush.xpose.msra.mxu0 %v243
    %261 = vmatmul.f32.gmra.mxu0 %v241
    %v262 = vpop.f32.mrf.mxu0
    %v263 = vadd.f32 %v130, %v262
    %264 = vdwg.mxu0
    %265 = vrot.lane.b32.xlu0 %v121, 96
    %v266 = vpop.permute.xlu0 %265
    %v267 = vsel %vm136, %v121, 0
    %v269 = vsel %vm136, %v266, 0
    %271 = vmatpush.xpose.msra.mxu0 0.0
    %272 = vmatpush.xpose.msra.mxu0 0.0
    %273 = vmatpush.xpose.msra.mxu0 0.0
    %274 = vmatpush.xpose.msra.mxu0 0.0
    %275 = vmatpush.xpose.msra.mxu0 0.0
    %276 = vmatpush.xpose.msra.mxu0 0.0
    %277 = vmatpush.xpose.msra.mxu0 0.0
    %278 = vmatpush.xpose.msra.mxu0 0.0
    %279 = vmatpush.xpose.msra.mxu0 0.0
    %280 = vmatpush.xpose.msra.mxu0 0.0
    %281 = vmatpush.xpose.msra.mxu0 0.0
    %282 = vmatpush.xpose.msra.mxu0 0.0
    %283 = vmatpush.xpose.msra.mxu0 0.0
    %284 = vmatpush.xpose.msra.mxu0 0.0
    %285 = vmatpush.xpose.msra.mxu0 0.0
    %286 = vmatpush.xpose.msra.mxu0 %v269
    %287 = vmatmul.f32.gmra.mxu0 %v267
    %v288 = vpop.f32.mrf.mxu0
    %v289 = vadd.f32 %v131, %v288
    %290 = vdwg.mxu0
    %291 = vrot.lane.b32.xlu0 %v123, 96
    %v292 = vpop.permute.xlu0 %291
    %v293 = vsel %vm136, %v123, 0
    %v295 = vsel %vm136, %v292, 0
    %297 = vmatpush.xpose.msra.mxu0 0.0
    %298 = vmatpush.xpose.msra.mxu0 0.0
    %299 = vmatpush.xpose.msra.mxu0 0.0
    %300 = vmatpush.xpose.msra.mxu0 0.0
    %301 = vmatpush.xpose.msra.mxu0 0.0
    %302 = vmatpush.xpose.msra.mxu0 0.0
    %303 = vmatpush.xpose.msra.mxu0 0.0
    %304 = vmatpush.xpose.msra.mxu0 0.0
    %305 = vmatpush.xpose.msra.mxu0 0.0
    %306 = vmatpush.xpose.msra.mxu0 0.0
    %307 = vmatpush.xpose.msra.mxu0 0.0
    %308 = vmatpush.xpose.msra.mxu0 0.0
    %309 = vmatpush.xpose.msra.mxu0 0.0
    %310 = vmatpush.xpose.msra.mxu0 0.0
    %311 = vmatpush.xpose.msra.mxu0 0.0
    %312 = vmatpush.xpose.msra.mxu0 %v295
    %313 = vmatmul.f32.gmra.mxu0 %v293
    %v314 = vpop.f32.mrf.mxu0
    %v315 = vadd.f32 %v132, %v314
    %316 = vdwg.mxu0
    %317 = vrot.lane.b32.xlu0 %v125, 96
    %v318 = vpop.permute.xlu0 %317
    %v319 = vsel %vm136, %v125, 0
    %v321 = vsel %vm136, %v318, 0
    %323 = vmatpush.xpose.msra.mxu0 0.0
    %324 = vmatpush.xpose.msra.mxu0 0.0
    %325 = vmatpush.xpose.msra.mxu0 0.0
    %326 = vmatpush.xpose.msra.mxu0 0.0
    %327 = vmatpush.xpose.msra.mxu0 0.0
    %328 = vmatpush.xpose.msra.mxu0 0.0
    %329 = vmatpush.xpose.msra.mxu0 0.0
    %330 = vmatpush.xpose.msra.mxu0 0.0
    %331 = vmatpush.xpose.msra.mxu0 0.0
    %332 = vmatpush.xpose.msra.mxu0 0.0
    %333 = vmatpush.xpose.msra.mxu0 0.0
    %334 = vmatpush.xpose.msra.mxu0 0.0
    %335 = vmatpush.xpose.msra.mxu0 0.0
    %336 = vmatpush.xpose.msra.mxu0 0.0
    %337 = vmatpush.xpose.msra.mxu0 0.0
    %338 = vmatpush.xpose.msra.mxu0 %v321
    %339 = vmatmul.f32.gmra.mxu0 %v319
    %v340 = vpop.f32.mrf.mxu0
    %v341 = vadd.f32 %v133, %v340
    %342 = vdwg.mxu0
    %v343 = vsel %vm136, %v159, -inf
    %344 = vmax.xlane.f32.xlu0 %v343
    %v345 = vpop.xlane.xlu0 %344
    %v346 = vsel %vm136, %v185, -inf
    %347 = vmax.xlane.f32.xlu0 %v346
    %v348 = vpop.xlane.xlu0 %347
    %v349 = vsel %vm136, %v211, -inf
    %350 = vmax.xlane.f32.xlu0 %v349
    %v351 = vpop.xlane.xlu0 %350
    %v352 = vsel %vm136, %v237, -inf
    %353 = vmax.xlane.f32.xlu0 %v352
    %v354 = vpop.xlane.xlu0 %353
    %v355 = vsel %vm136, %v263, -inf
    %356 = vmax.xlane.f32.xlu0 %v355
    %v357 = vpop.xlane.xlu0 %356
    %v358 = vsel %vm136, %v289, -inf
    %359 = vmax.xlane.f32.xlu0 %v358
    %v360 = vpop.xlane.xlu0 %359
    %v361 = vsel %vm136, %v315, -inf
    %362 = vmax.xlane.f32.xlu0 %v361
    %v363 = vpop.xlane.xlu0 %362
    %v364 = vsel %vm136, %v341, -inf
    %365 = vmax.xlane.f32.xlu0 %v364
    %v366 = vpop.xlane.xlu0 %365
    %v367 = vsub.f32 %v159, %v345
    %v368 = vsub.f32 %v185, %v348
    %v369 = vsub.f32 %v211, %v351
    %v370 = vsub.f32 %v237, %v354
    %v371 = vsub.f32 %v263, %v357
    %v372 = vsub.f32 %v289, %v360
    %v373 = vsub.f32 %v315, %v363
    %v374 = vsub.f32 %v341, %v366
    %v375 = vmul.f32 %v367, 1.442695
    %v376 = vpow.pop %v375
    %v377 = vmul.f32 %v368, 1.442695
    %v378 = vpow.pop %v377
    %v379 = vmul.f32 %v369, 1.442695
    %v380 = vpow.pop %v379
    %v381 = vmul.f32 %v370, 1.442695
    %v382 = vpow.pop %v381
    %v383 = vmul.f32 %v371, 1.442695
    %v384 = vpow.pop %v383
    %v385 = vmul.f32 %v372, 1.442695
    %v386 = vpow.pop %v385
    %v387 = vmul.f32 %v373, 1.442695
    %v388 = vpow.pop %v387
    %v389 = vmul.f32 %v374, 1.442695
    %v390 = vpow.pop %v389
    %v391 = vsel %vm136, %v376, 0.0
    %392 = vadd.xlane.f32.xlu0 %v391
    %v393 = vpop.xlane.xlu0 %392
    %v394 = vsel %vm136, %v378, 0.0
    %395 = vadd.xlane.f32.xlu0 %v394
    %v396 = vpop.xlane.xlu0 %395
    %v397 = vsel %vm136, %v380, 0.0
    %398 = vadd.xlane.f32.xlu0 %v397
    %v399 = vpop.xlane.xlu0 %398
    %v400 = vsel %vm136, %v382, 0.0
    %401 = vadd.xlane.f32.xlu0 %v400
    %v402 = vpop.xlane.xlu0 %401
    %v403 = vsel %vm136, %v384, 0.0
    %404 = vadd.xlane.f32.xlu0 %v403
    %v405 = vpop.xlane.xlu0 %404
    %v406 = vsel %vm136, %v386, 0.0
    %407 = vadd.xlane.f32.xlu0 %v406
    %v408 = vpop.xlane.xlu0 %407
    %v409 = vsel %vm136, %v388, 0.0
    %410 = vadd.xlane.f32.xlu0 %v409
    %v411 = vpop.xlane.xlu0 %410
    %v412 = vsel %vm136, %v390, 0.0
    %413 = vadd.xlane.f32.xlu0 %v412
    %v414 = vpop.xlane.xlu0 %413
    %v415 = vrcp.pop %v393
    %v416 = vmul.f32 %v393, %v415
    %v417 = vsub.f32 1.0, %v416
    %v418 = vmul.f32 %v415, %v417
    %v419 = vadd.f32 %v415, %v418
    %vm420 = vweird.f32 %v393
    %vm421 = vweird.f32 %v415
    %vm422 = vmor %vm420, %vm421
    %v423 = vsel %vm422, %v415, %v419
    %v424 = vand.u32 2147483647, %v393
    %vm425 = vcmp.eq.f32.partialorder %v424, 8.507059e+37
    %v426 = vand.u32 %v393, 2147483648
    %v427 = vor.u32 1.1754944e-38, %v426
    %v428 = vsel %vm425, %v427, %v423
    %v429 = vmul.f32 %v376, %v428
    %v430 = vrcp.pop %v396
    %v431 = vmul.f32 %v396, %v430
    %v432 = vsub.f32 1.0, %v431
    %v433 = vmul.f32 %v430, %v432
    %v434 = vadd.f32 %v430, %v433
    %vm435 = vweird.f32 %v396
    %vm436 = vweird.f32 %v430
    %vm437 = vmor %vm435, %vm436
    %v438 = vsel %vm437, %v430, %v434
    %v439 = vand.u32 2147483647, %v396
    %vm440 = vcmp.eq.f32.partialorder %v439, 8.507059e+37
    %v441 = vand.u32 %v396, 2147483648
    %v442 = vor.u32 1.1754944e-38, %v441
    %v443 = vsel %vm440, %v442, %v438
    %v444 = vmul.f32 %v378, %v443
    %v445 = vrcp.pop %v399
    %v446 = vmul.f32 %v399, %v445
    %v447 = vsub.f32 1.0, %v446
    %v448 = vmul.f32 %v445, %v447
    %v449 = vadd.f32 %v445, %v448
    %vm450 = vweird.f32 %v399
    %vm451 = vweird.f32 %v445
    %vm452 = vmor %vm450, %vm451
    %v453 = vsel %vm452, %v445, %v449
    %v454 = vand.u32 2147483647, %v399
    %vm455 = vcmp.eq.f32.partialorder %v454, 8.507059e+37
    %v456 = vand.u32 %v399, 2147483648
    %v457 = vor.u32 1.1754944e-38, %v456
    %v458 = vsel %vm455, %v457, %v453
    %v459 = vmul.f32 %v380, %v458
    %v460 = vrcp.pop %v402
    %v461 = vmul.f32 %v402, %v460
    %v462 = vsub.f32 1.0, %v461
    %v463 = vmul.f32 %v460, %v462
    %v464 = vadd.f32 %v460, %v463
    %vm465 = vweird.f32 %v402
    %vm466 = vweird.f32 %v460
    %vm467 = vmor %vm465, %vm466
    %v468 = vsel %vm467, %v460, %v464
    %v469 = vand.u32 2147483647, %v402
    %vm470 = vcmp.eq.f32.partialorder %v469, 8.507059e+37
    %v471 = vand.u32 %v402, 2147483648
    %v472 = vor.u32 1.1754944e-38, %v471
    %v473 = vsel %vm470, %v472, %v468
    %v474 = vmul.f32 %v382, %v473
    %v475 = vrcp.pop %v405
    %v476 = vmul.f32 %v405, %v475
    %v477 = vsub.f32 1.0, %v476
    %v478 = vmul.f32 %v475, %v477
    %v479 = vadd.f32 %v475, %v478
    %vm480 = vweird.f32 %v405
    %vm481 = vweird.f32 %v475
    %vm482 = vmor %vm480, %vm481
    %v483 = vsel %vm482, %v475, %v479
    %v484 = vand.u32 2147483647, %v405
    %vm485 = vcmp.eq.f32.partialorder %v484, 8.507059e+37
    %v486 = vand.u32 %v405, 2147483648
    %v487 = vor.u32 1.1754944e-38, %v486
    %v488 = vsel %vm485, %v487, %v483
    %v489 = vmul.f32 %v384, %v488
    %v490 = vrcp.pop %v408
    %v491 = vmul.f32 %v408, %v490
    %v492 = vsub.f32 1.0, %v491
    %v493 = vmul.f32 %v490, %v492
    %v494 = vadd.f32 %v490, %v493
    %vm495 = vweird.f32 %v408
    %vm496 = vweird.f32 %v490
    %vm497 = vmor %vm495, %vm496
    %v498 = vsel %vm497, %v490, %v494
    %v499 = vand.u32 2147483647, %v408
    %vm500 = vcmp.eq.f32.partialorder %v499, 8.507059e+37
    %v501 = vand.u32 %v408, 2147483648
    %v502 = vor.u32 1.1754944e-38, %v501
    %v503 = vsel %vm500, %v502, %v498
    %v504 = vmul.f32 %v386, %v503
    %v505 = vrcp.pop %v411
    %v506 = vmul.f32 %v411, %v505
    %v507 = vsub.f32 1.0, %v506
    %v508 = vmul.f32 %v505, %v507
    %v509 = vadd.f32 %v505, %v508
    %vm510 = vweird.f32 %v411
    %vm511 = vweird.f32 %v505
    %vm512 = vmor %vm510, %vm511
    %v513 = vsel %vm512, %v505, %v509
    %v514 = vand.u32 2147483647, %v411
    %vm515 = vcmp.eq.f32.partialorder %v514, 8.507059e+37
    %v516 = vand.u32 %v411, 2147483648
    %v517 = vor.u32 1.1754944e-38, %v516
    %v518 = vsel %vm515, %v517, %v513
    %v519 = vmul.f32 %v388, %v518
    %v520 = vrcp.pop %v414
    %v521 = vmul.f32 %v414, %v520
    %v522 = vsub.f32 1.0, %v521
    %v523 = vmul.f32 %v520, %v522
    %v524 = vadd.f32 %v520, %v523
    %vm525 = vweird.f32 %v414
    %vm526 = vweird.f32 %v520
    %vm527 = vmor %vm525, %vm526
    %v528 = vsel %vm527, %v520, %v524
    %v529 = vand.u32 2147483647, %v414
    %vm530 = vcmp.eq.f32.partialorder %v529, 8.507059e+37
    %v531 = vand.u32 %v414, 2147483648
    %v532 = vor.u32 1.1754944e-38, %v531
    %v533 = vsel %vm530, %v532, %v528
    %v534 = vmul.f32 %v390, %v533
    %535 = vst.msk [vmem:[%s8] sm:$0xff] %vm136, %v429
    %536 = vst.msk [vmem:[%s8 + $0x8] sm:$0xff] %vm136, %v444
    %537 = vst.msk [vmem:[%s8 + $0x10] sm:$0xff] %vm136, %v459
    %538 = vst.msk [vmem:[%s8 + $0x18] sm:$0xff] %vm136, %v474
    %539 = vst.msk [vmem:[%s8 + $0x20] sm:$0xff] %vm136, %v489
    %540 = vst.msk [vmem:[%s8 + $0x28] sm:$0xff] %vm136, %v504
    %541 = vst.msk [vmem:[%s8 + $0x30] sm:$0xff] %vm136, %v519
    %542 = vst.msk [vmem:[%s8 + $0x38] sm:$0xff] %vm136, %v534
    %543 = vrot.lane.b32.xlu0 %v107, 64
    %v544 = vpop.permute.xlu0 %543
    %v547 = vsel %vm136, %v429, 0
    %549 = vmatpush.msra.mxu0 0.0
    %550 = vmatpush.msra.mxu0 0.0
    %551 = vmatpush.msra.mxu0 0.0
    %552 = vmatpush.msra.mxu0 0.0
    %553 = vmatpush.msra.mxu0 0.0
    %554 = vmatpush.msra.mxu0 0.0
    %555 = vmatpush.msra.mxu0 0.0
    %556 = vmatpush.msra.mxu0 0.0
    %557 = vmatpush.msra.mxu0 0.0
    %558 = vmatpush.msra.mxu0 0.0
    %559 = vmatpush.msra.mxu0 0.0
    %560 = vmatpush.msra.mxu0 0.0
    %561 = vmatpush.msra.mxu0 0.0
    %562 = vmatpush.msra.mxu0 0.0
    %563 = vmatpush.msra.mxu0 0.0
    %564 = vmatpush.msra.mxu0 %v544
    %565 = vmatmul.f32.gmra.mxu0 %v547
    %v566 = vpop.f32.mrf.mxu0
    %v567 = vadd.f32 0.0, %v566
    %568 = vdwg.mxu0
    %569 = vrot.lane.b32.xlu0 %v110, 64
    %v570 = vpop.permute.xlu0 %569
    %v573 = vsel %vm136, %v444, 0
    %575 = vmatpush.msra.mxu0 0.0
    %576 = vmatpush.msra.mxu0 0.0
    %577 = vmatpush.msra.mxu0 0.0
    %578 = vmatpush.msra.mxu0 0.0
    %579 = vmatpush.msra.mxu0 0.0
    %580 = vmatpush.msra.mxu0 0.0
    %581 = vmatpush.msra.mxu0 0.0
    %582 = vmatpush.msra.mxu0 0.0
    %583 = vmatpush.msra.mxu0 0.0
    %584 = vmatpush.msra.mxu0 0.0
    %585 = vmatpush.msra.mxu0 0.0
    %586 = vmatpush.msra.mxu0 0.0
    %587 = vmatpush.msra.mxu0 0.0
    %588 = vmatpush.msra.mxu0 0.0
    %589 = vmatpush.msra.mxu0 0.0
    %590 = vmatpush.msra.mxu0 %v570
    %591 = vmatmul.f32.gmra.mxu0 %v573
    %v592 = vpop.f32.mrf.mxu0
    %v593 = vadd.f32 0.0, %v592
    %594 = vdwg.mxu0
    %595 = vrot.lane.b32.xlu0 %v115, 64
    %v596 = vpop.permute.xlu0 %595
    %v599 = vsel %vm136, %v459, 0
    %601 = vmatpush.msra.mxu0 0.0
    %602 = vmatpush.msra.mxu0 0.0
    %603 = vmatpush.msra.mxu0 0.0
    %604 = vmatpush.msra.mxu0 0.0
    %605 = vmatpush.msra.mxu0 0.0
    %606 = vmatpush.msra.mxu0 0.0
    %607 = vmatpush.msra.mxu0 0.0
    %608 = vmatpush.msra.mxu0 0.0
    %609 = vmatpush.msra.mxu0 0.0
    %610 = vmatpush.msra.mxu0 0.0
    %611 = vmatpush.msra.mxu0 0.0
    %612 = vmatpush.msra.mxu0 0.0
    %613 = vmatpush.msra.mxu0 0.0
    %614 = vmatpush.msra.mxu0 0.0
    %615 = vmatpush.msra.mxu0 0.0
    %616 = vmatpush.msra.mxu0 %v596
    %617 = vmatmul.f32.gmra.mxu0 %v599
    %v618 = vpop.f32.mrf.mxu0
    %v619 = vadd.f32 0.0, %v618
    %620 = vdwg.mxu0
    %621 = vrot.lane.b32.xlu0 %v117, 64
    %v622 = vpop.permute.xlu0 %621
    %v625 = vsel %vm136, %v474, 0
    %627 = vmatpush.msra.mxu0 0.0
    %628 = vmatpush.msra.mxu0 0.0
    %629 = vmatpush.msra.mxu0 0.0
    %630 = vmatpush.msra.mxu0 0.0
    %631 = vmatpush.msra.mxu0 0.0
    %632 = vmatpush.msra.mxu0 0.0
    %633 = vmatpush.msra.mxu0 0.0
    %634 = vmatpush.msra.mxu0 0.0
    %635 = vmatpush.msra.mxu0 0.0
    %636 = vmatpush.msra.mxu0 0.0
    %637 = vmatpush.msra.mxu0 0.0
    %638 = vmatpush.msra.mxu0 0.0
    %639 = vmatpush.msra.mxu0 0.0
    %640 = vmatpush.msra.mxu0 0.0
    %641 = vmatpush.msra.mxu0 0.0
    %642 = vmatpush.msra.mxu0 %v622
    %643 = vmatmul.f32.gmra.mxu0 %v625
    %v644 = vpop.f32.mrf.mxu0
    %v645 = vadd.f32 0.0, %v644
    %646 = vdwg.mxu0
    %647 = vrot.lane.b32.xlu0 %v119, 64
    %v648 = vpop.permute.xlu0 %647
    %v651 = vsel %vm136, %v489, 0
    %653 = vmatpush.msra.mxu0 0.0
    %654 = vmatpush.msra.mxu0 0.0
    %655 = vmatpush.msra.mxu0 0.0
    %656 = vmatpush.msra.mxu0 0.0
    %657 = vmatpush.msra.mxu0 0.0
    %658 = vmatpush.msra.mxu0 0.0
    %659 = vmatpush.msra.mxu0 0.0
    %660 = vmatpush.msra.mxu0 0.0
    %661 = vmatpush.msra.mxu0 0.0
    %662 = vmatpush.msra.mxu0 0.0
    %663 = vmatpush.msra.mxu0 0.0
    %664 = vmatpush.msra.mxu0 0.0
    %665 = vmatpush.msra.mxu0 0.0
    %666 = vmatpush.msra.mxu0 0.0
    %667 = vmatpush.msra.mxu0 0.0
    %668 = vmatpush.msra.mxu0 %v648
    %669 = vmatmul.f32.gmra.mxu0 %v651
    %v670 = vpop.f32.mrf.mxu0
    %v671 = vadd.f32 0.0, %v670
    %672 = vdwg.mxu0
    %673 = vrot.lane.b32.xlu0 %v121, 64
    %v674 = vpop.permute.xlu0 %673
    %v677 = vsel %vm136, %v504, 0
    %679 = vmatpush.msra.mxu0 0.0
    %680 = vmatpush.msra.mxu0 0.0
    %681 = vmatpush.msra.mxu0 0.0
    %682 = vmatpush.msra.mxu0 0.0
    %683 = vmatpush.msra.mxu0 0.0
    %684 = vmatpush.msra.mxu0 0.0
    %685 = vmatpush.msra.mxu0 0.0
    %686 = vmatpush.msra.mxu0 0.0
    %687 = vmatpush.msra.mxu0 0.0
    %688 = vmatpush.msra.mxu0 0.0
    %689 = vmatpush.msra.mxu0 0.0
    %690 = vmatpush.msra.mxu0 0.0
    %691 = vmatpush.msra.mxu0 0.0
    %692 = vmatpush.msra.mxu0 0.0
    %693 = vmatpush.msra.mxu0 0.0
    %694 = vmatpush.msra.mxu0 %v674
    %695 = vmatmul.f32.gmra.mxu0 %v677
    %v696 = vpop.f32.mrf.mxu0
    %v697 = vadd.f32 0.0, %v696
    %698 = vdwg.mxu0
    %699 = vrot.lane.b32.xlu0 %v123, 64
    %v700 = vpop.permute.xlu0 %699
    %v703 = vsel %vm136, %v519, 0
    %705 = vmatpush.msra.mxu0 0.0
    %706 = vmatpush.msra.mxu0 0.0
    %707 = vmatpush.msra.mxu0 0.0
    %708 = vmatpush.msra.mxu0 0.0
    %709 = vmatpush.msra.mxu0 0.0
    %710 = vmatpush.msra.mxu0 0.0
    %711 = vmatpush.msra.mxu0 0.0
    %712 = vmatpush.msra.mxu0 0.0
    %713 = vmatpush.msra.mxu0 0.0
    %714 = vmatpush.msra.mxu0 0.0
    %715 = vmatpush.msra.mxu0 0.0
    %716 = vmatpush.msra.mxu0 0.0
    %717 = vmatpush.msra.mxu0 0.0
    %718 = vmatpush.msra.mxu0 0.0
    %719 = vmatpush.msra.mxu0 0.0
    %720 = vmatpush.msra.mxu0 %v700
    %721 = vmatmul.f32.gmra.mxu0 %v703
    %v722 = vpop.f32.mrf.mxu0
    %v723 = vadd.f32 0.0, %v722
    %724 = vdwg.mxu0
    %725 = vrot.lane.b32.xlu0 %v125, 64
    %v726 = vpop.permute.xlu0 %725
    %v729 = vsel %vm136, %v534, 0
    %731 = vmatpush.msra.mxu0 0.0
    %732 = vmatpush.msra.mxu0 0.0
    %733 = vmatpush.msra.mxu0 0.0
    %734 = vmatpush.msra.mxu0 0.0
    %735 = vmatpush.msra.mxu0 0.0
    %736 = vmatpush.msra.mxu0 0.0
    %737 = vmatpush.msra.mxu0 0.0
    %738 = vmatpush.msra.mxu0 0.0
    %739 = vmatpush.msra.mxu0 0.0
    %740 = vmatpush.msra.mxu0 0.0
    %741 = vmatpush.msra.mxu0 0.0
    %742 = vmatpush.msra.mxu0 0.0
    %743 = vmatpush.msra.mxu0 0.0
    %744 = vmatpush.msra.mxu0 0.0
    %745 = vmatpush.msra.mxu0 0.0
    %746 = vmatpush.msra.mxu0 %v726
    %747 = vmatmul.f32.gmra.mxu0 %v729
    %v748 = vpop.f32.mrf.mxu0
    %v749 = vadd.f32 0.0, %v748
    %750 = vdwg.mxu0
    %753 = vrot.lane.b32.xlu0 %v619, 8
    %v754 = vpop.permute.xlu0 %753
    %755 = vrot.lane.b32.xlu0 %v645, 8
    %v756 = vpop.permute.xlu0 %755
    %761 = vrot.lane.b32.xlu0 %v671, 16
    %v762 = vpop.permute.xlu0 %761
    %763 = vrot.lane.b32.xlu0 %v697, 16
    %v764 = vpop.permute.xlu0 %763
    %769 = vrot.lane.b32.xlu0 %v723, 24
    %v770 = vpop.permute.xlu0 %769
    %771 = vrot.lane.b32.xlu0 %v749, 24
    %v772 = vpop.permute.xlu0 %771
    %v775 = vsel %vm136, %v567, %v754
    %v776 = vsel %vm136, %v593, %v756
    %vm777 = vcmask 130048
    %v778 = vsel %vm777, %v775, %v762
    %v779 = vsel %vm777, %v776, %v764
    %vm780 = vcmask 195584
    %v781 = vsel %vm780, %v778, %v770
    %v782 = vsel %vm780, %v779, %v772
    %v783 = vld [vmem:[%s4] sm:$0xff]
    %v784 = vld [vmem:[%s4 + $0x8] sm:$0xff]
    %v785 = vld [vmem:[%s4 + $0x10] sm:$0xff]
    %v786 = vld [vmem:[%s4 + $0x18] sm:$0xff]
    %v788 = vsel %vm34, %v781, 0
    %v791 = vsel %vm34, %v782, 0
    %793 = vmatpush.msra.mxu0 0.0
    %794 = vmatpush.msra.mxu0 0.0
    %795 = vmatpush.msra.mxu0 0.0
    %796 = vmatpush.msra.mxu0 0.0
    %797 = vmatpush.msra.mxu0 0.0
    %798 = vmatpush.msra.mxu0 0.0
    %799 = vmatpush.msra.mxu0 0.0
    %800 = vmatpush.msra.mxu0 0.0
    %801 = vmatpush.msra.mxu0 0.0
    %802 = vmatpush.msra.mxu0 0.0
    %803 = vmatpush.msra.mxu0 0.0
    %804 = vmatpush.msra.mxu0 0.0
    %805 = vmatpush.msra.mxu0 %v786
    %806 = vmatpush.msra.mxu0 %v785
    %807 = vmatpush.msra.mxu0 %v784
    %808 = vmatpush.msra.mxu0 %v783
    %809 = vmatmul.f32.gmra.mxu0 %v788
    %v810 = vpop.f32.mrf.mxu0
    %v811 = vadd.f32 0.0, %v810
    %812 = vmatmul.f32.gmra.mxu0 %v791
    %v813 = vpop.f32.mrf.mxu0
    %v814 = vadd.f32 0.0, %v813
    %815 = vdwg.mxu0
    %v816 = vadd.f32 %v29, %v811
    %v817 = vadd.f32 %v30, %v814
    %s818 = scalar_lea.vmem %s2, 2
    %v819 = vld [vmem:[%s818] sm:$0x1]
    %v820 = vmul.f32 %v816, %v816
    %v821 = vmul.f32 %v817, %v817
    %v822 = vsel %vm34, %v820, 0.0
    %823 = vadd.xlane.f32.xlu0 %v822
    %v824 = vpop.xlane.xlu0 %823
    %v825 = vsel %vm34, %v821, 0.0
    %826 = vadd.xlane.f32.xlu0 %v825
    %v827 = vpop.xlane.xlu0 %826
    %v828 = vmul.f32 %v824, %v47
    %v829 = vmul.f32 %v827, %v47
    %v830 = vadd.f32 %v828, 1e-06
    %v831 = vadd.f32 %v829, 1e-06
    %v832 = vrsqrt.pop %v830
    %v833 = vmul.f32 %v832, %v830
    %v834 = vmul.f32 %v833, %v832
    %v835 = vmul.f32 0.5, %v834
    %v836 = vsub.f32 1.5, %v835
    %v837 = vmul.f32 %v832, %v836
    %vm838 = vweird.f32 %v830
    %vm839 = vweird.f32 %v832
    %vm840 = vmor %vm838, %vm839
    %v841 = vsel %vm840, %v832, %v837
    %v842 = vrsqrt.pop %v831
    %v843 = vmul.f32 %v842, %v831
    %v844 = vmul.f32 %v843, %v842
    %v845 = vmul.f32 0.5, %v844
    %v846 = vsub.f32 1.5, %v845
    %v847 = vmul.f32 %v842, %v846
    %vm848 = vweird.f32 %v831
    %vm849 = vweird.f32 %v842
    %vm850 = vmor %vm848, %vm849
    %v851 = vsel %vm850, %v842, %v847
    %v852 = vmul.f32 %v816, %v841
    %v853 = vmul.f32 %v817, %v851
    %v855 = vperm.slane %v819, 0
    %v857 = vmul.f32 %v852, %v855
    %v858 = vmul.f32 %v853, %v855
    %v859 = vld [vmem:[%s5] sm:$0xff]
    %v860 = vld [vmem:[%s5 + $0x8] sm:$0xff]
    %v861 = vld [vmem:[%s5 + $0x10] sm:$0xff]
    %v862 = vld [vmem:[%s5 + $0x18] sm:$0xff]
    %v864 = vsel %vm34, %v857, 0
    %v867 = vsel %vm34, %v858, 0
    %869 = vmatpush.msra.mxu0 0.0
    %870 = vmatpush.msra.mxu0 0.0
    %871 = vmatpush.msra.mxu0 0.0
    %872 = vmatpush.msra.mxu0 0.0
    %873 = vmatpush.msra.mxu0 0.0
    %874 = vmatpush.msra.mxu0 0.0
    %875 = vmatpush.msra.mxu0 0.0
    %876 = vmatpush.msra.mxu0 0.0
    %877 = vmatpush.msra.mxu0 0.0
    %878 = vmatpush.msra.mxu0 0.0
    %879 = vmatpush.msra.mxu0 0.0
    %880 = vmatpush.msra.mxu0 0.0
    %881 = vmatpush.msra.mxu0 %v862
    %882 = vmatpush.msra.mxu0 %v861
    %883 = vmatpush.msra.mxu0 %v860
    %884 = vmatpush.msra.mxu0 %v859
    %885 = vmatmul.f32.gmra.mxu0 %v864
    %v886 = vpop.f32.mrf.mxu0
    %v887 = vadd.f32 0.0, %v886
    %888 = vmatmul.f32.gmra.mxu0 %v867
    %v889 = vpop.f32.mrf.mxu0
    %v890 = vadd.f32 0.0, %v889
    %891 = vdwg.mxu0
    %v892 = vmax.f32 %v887, 0.0
    %v893 = vmax.f32 %v890, 0.0
    %v894 = vld [vmem:[%s6] sm:$0xff]
    %v895 = vld [vmem:[%s6 + $0x8] sm:$0xff]
    %v896 = vld [vmem:[%s6 + $0x10] sm:$0xff]
    %v897 = vld [vmem:[%s6 + $0x18] sm:$0xff]
    %v898 = vld [vmem:[%s6 + $0x20] sm:$0xff]
    %v899 = vld [vmem:[%s6 + $0x28] sm:$0xff]
    %v900 = vld [vmem:[%s6 + $0x30] sm:$0xff]
    %v901 = vld [vmem:[%s6 + $0x38] sm:$0xff]
    %vm902 = vcmask 523264
    %v904 = vsel %vm902, %v892, 0
    %v907 = vsel %vm902, %v893, 0
    %909 = vmatpush.msra.mxu0 0.0
    %910 = vmatpush.msra.mxu0 0.0
    %911 = vmatpush.msra.mxu0 0.0
    %912 = vmatpush.msra.mxu0 0.0
    %913 = vmatpush.msra.mxu0 0.0
    %914 = vmatpush.msra.mxu0 0.0
    %915 = vmatpush.msra.mxu0 0.0
    %916 = vmatpush.msra.mxu0 0.0
    %917 = vmatpush.msra.mxu0 %v901
    %918 = vmatpush.msra.mxu0 %v900
    %919 = vmatpush.msra.mxu0 %v899
    %920 = vmatpush.msra.mxu0 %v898
    %921 = vmatpush.msra.mxu0 %v897
    %922 = vmatpush.msra.mxu0 %v896
    %923 = vmatpush.msra.mxu0 %v895
    %924 = vmatpush.msra.mxu0 %v894
    %925 = vmatmul.f32.gmra.mxu0 %v904
    %v926 = vpop.f32.mrf.mxu0
    %v927 = vadd.f32 0.0, %v926
    %928 = vmatmul.f32.gmra.mxu0 %v907
    %v929 = vpop.f32.mrf.mxu0
    %v930 = vadd.f32 0.0, %v929
    %931 = vdwg.mxu0
    %v932 = vadd.f32 %v816, %v927
    %v933 = vadd.f32 %v817, %v930
    %s934 = scalar_lea.vmem %s2, 1
    %v935 = vld [vmem:[%s934] sm:$0x1]
    %v936 = vmul.f32 %v932, %v932
    %v937 = vmul.f32 %v933, %v933
    %v938 = vsel %vm34, %v936, 0.0
    %939 = vadd.xlane.f32.xlu0 %v938
    %v940 = vpop.xlane.xlu0 %939
    %v941 = vsel %vm34, %v937, 0.0
    %942 = vadd.xlane.f32.xlu0 %v941
    %v943 = vpop.xlane.xlu0 %942
    %v944 = vmul.f32 %v940, %v47
    %v945 = vmul.f32 %v943, %v47
    %v946 = vadd.f32 %v944, 1e-06
    %v947 = vadd.f32 %v945, 1e-06
    %v948 = vrsqrt.pop %v946
    %v949 = vmul.f32 %v948, %v946
    %v950 = vmul.f32 %v949, %v948
    %v951 = vmul.f32 0.5, %v950
    %v952 = vsub.f32 1.5, %v951
    %v953 = vmul.f32 %v948, %v952
    %vm954 = vweird.f32 %v946
    %vm955 = vweird.f32 %v948
    %vm956 = vmor %vm954, %vm955
    %v957 = vsel %vm956, %v948, %v953
    %v958 = vrsqrt.pop %v947
    %v959 = vmul.f32 %v958, %v947
    %v960 = vmul.f32 %v959, %v958
    %v961 = vmul.f32 0.5, %v960
    %v962 = vsub.f32 1.5, %v961
    %v963 = vmul.f32 %v958, %v962
    %vm964 = vweird.f32 %v947
    %vm965 = vweird.f32 %v958
    %vm966 = vmor %vm964, %vm965
    %v967 = vsel %vm966, %v958, %v963
    %v968 = vmul.f32 %v932, %v957
    %v969 = vmul.f32 %v933, %v967
    %v971 = vperm.slane %v935, 0
    %v973 = vmul.f32 %v968, %v971
    %v974 = vmul.f32 %v969, %v971
    %s975 = scalar_lea.vmem %s3, 32
    %v976 = vld [vmem:[%s975] sm:$0xff]
    %v977 = vld [vmem:[%s975 + $0x8] sm:$0xff]
    %v978 = vld [vmem:[%s975 + $0x10] sm:$0xff]
    %v979 = vld [vmem:[%s975 + $0x18] sm:$0xff]
    %v981 = vsel %vm34, %v973, 0
    %v984 = vsel %vm34, %v974, 0
    %986 = vmatpush.msra.mxu0 0.0
    %987 = vmatpush.msra.mxu0 0.0
    %988 = vmatpush.msra.mxu0 0.0
    %989 = vmatpush.msra.mxu0 0.0
    %990 = vmatpush.msra.mxu0 0.0
    %991 = vmatpush.msra.mxu0 0.0
    %992 = vmatpush.msra.mxu0 0.0
    %993 = vmatpush.msra.mxu0 0.0
    %994 = vmatpush.msra.mxu0 0.0
    %995 = vmatpush.msra.mxu0 0.0
    %996 = vmatpush.msra.mxu0 0.0
    %997 = vmatpush.msra.mxu0 0.0
    %998 = vmatpush.msra.mxu0 %v979
    %999 = vmatpush.msra.mxu0 %v978
    %1000 = vmatpush.msra.mxu0 %v977
    %1001 = vmatpush.msra.mxu0 %v976
    %1002 = vmatmul.f32.gmra.mxu0 %v981
    %v1003 = vpop.f32.mrf.mxu0
    %v1004 = vadd.f32 0.0, %v1003
    %1005 = vmatmul.f32.gmra.mxu0 %v984
    %v1006 = vpop.f32.mrf.mxu0
    %v1007 = vadd.f32 0.0, %v1006
    %1008 = vdwg.mxu0
    %1011 = vrot.lane.b32.xlu0 %v1004, 120
    %v1012 = vpop.permute.xlu0 %1011
    %1013 = vrot.lane.b32.xlu0 %v1007, 120
    %v1014 = vpop.permute.xlu0 %1013
    %1015 = vrot.lane.b32.xlu0 %v1004, 112
    %v1016 = vpop.permute.xlu0 %1015
    %1017 = vrot.lane.b32.xlu0 %v1007, 112
    %v1018 = vpop.permute.xlu0 %1017
    %1019 = vrot.lane.b32.xlu0 %v1004, 104
    %v1020 = vpop.permute.xlu0 %1019
    %1021 = vrot.lane.b32.xlu0 %v1007, 104
    %v1022 = vpop.permute.xlu0 %1021
    %s1023 = scalar_lea.vmem %s1, 64
    %v1024 = vld [vmem:[%s1023] sm:$0xff]
    %v1025 = vld [vmem:[%s1023 + $0x8] sm:$0xff]
    %v1026 = vld [vmem:[%s1023 + $0x10] sm:$0xff]
    %v1027 = vld [vmem:[%s1023 + $0x18] sm:$0xff]
    %v1028 = vld [vmem:[%s1023 + $0x20] sm:$0xff]
    %v1029 = vld [vmem:[%s1023 + $0x28] sm:$0xff]
    %v1030 = vld [vmem:[%s1023 + $0x30] sm:$0xff]
    %v1031 = vld [vmem:[%s1023 + $0x38] sm:$0xff]
    %1032 = vrot.lane.b32.xlu0 %v1004, 96
    %v1033 = vpop.permute.xlu0 %1032
    %v1034 = vsel %vm136, %v1004, 0
    %v1036 = vsel %vm136, %v1033, 0
    %1038 = vmatpush.xpose.msra.mxu0 0.0
    %1039 = vmatpush.xpose.msra.mxu0 0.0
    %1040 = vmatpush.xpose.msra.mxu0 0.0
    %1041 = vmatpush.xpose.msra.mxu0 0.0
    %1042 = vmatpush.xpose.msra.mxu0 0.0
    %1043 = vmatpush.xpose.msra.mxu0 0.0
    %1044 = vmatpush.xpose.msra.mxu0 0.0
    %1045 = vmatpush.xpose.msra.mxu0 0.0
    %1046 = vmatpush.xpose.msra.mxu0 0.0
    %1047 = vmatpush.xpose.msra.mxu0 0.0
    %1048 = vmatpush.xpose.msra.mxu0 0.0
    %1049 = vmatpush.xpose.msra.mxu0 0.0
    %1050 = vmatpush.xpose.msra.mxu0 0.0
    %1051 = vmatpush.xpose.msra.mxu0 0.0
    %1052 = vmatpush.xpose.msra.mxu0 0.0
    %1053 = vmatpush.xpose.msra.mxu0 %v1036
    %1054 = vmatmul.f32.gmra.mxu0 %v1034
    %v1055 = vpop.f32.mrf.mxu0
    %v1056 = vadd.f32 %v1024, %v1055
    %1057 = vdwg.mxu0
    %1058 = vrot.lane.b32.xlu0 %v1007, 96
    %v1059 = vpop.permute.xlu0 %1058
    %v1060 = vsel %vm136, %v1007, 0
    %v1062 = vsel %vm136, %v1059, 0
    %1064 = vmatpush.xpose.msra.mxu0 0.0
    %1065 = vmatpush.xpose.msra.mxu0 0.0
    %1066 = vmatpush.xpose.msra.mxu0 0.0
    %1067 = vmatpush.xpose.msra.mxu0 0.0
    %1068 = vmatpush.xpose.msra.mxu0 0.0
    %1069 = vmatpush.xpose.msra.mxu0 0.0
    %1070 = vmatpush.xpose.msra.mxu0 0.0
    %1071 = vmatpush.xpose.msra.mxu0 0.0
    %1072 = vmatpush.xpose.msra.mxu0 0.0
    %1073 = vmatpush.xpose.msra.mxu0 0.0
    %1074 = vmatpush.xpose.msra.mxu0 0.0
    %1075 = vmatpush.xpose.msra.mxu0 0.0
    %1076 = vmatpush.xpose.msra.mxu0 0.0
    %1077 = vmatpush.xpose.msra.mxu0 0.0
    %1078 = vmatpush.xpose.msra.mxu0 0.0
    %1079 = vmatpush.xpose.msra.mxu0 %v1062
    %1080 = vmatmul.f32.gmra.mxu0 %v1060
    %v1081 = vpop.f32.mrf.mxu0
    %v1082 = vadd.f32 %v1025, %v1081
    %1083 = vdwg.mxu0
    %1084 = vrot.lane.b32.xlu0 %v1012, 96
    %v1085 = vpop.permute.xlu0 %1084
    %v1086 = vsel %vm136, %v1012, 0
    %v1088 = vsel %vm136, %v1085, 0
    %1090 = vmatpush.xpose.msra.mxu0 0.0
    %1091 = vmatpush.xpose.msra.mxu0 0.0
    %1092 = vmatpush.xpose.msra.mxu0 0.0
    %1093 = vmatpush.xpose.msra.mxu0 0.0
    %1094 = vmatpush.xpose.msra.mxu0 0.0
    %1095 = vmatpush.xpose.msra.mxu0 0.0
    %1096 = vmatpush.xpose.msra.mxu0 0.0
    %1097 = vmatpush.xpose.msra.mxu0 0.0
    %1098 = vmatpush.xpose.msra.mxu0 0.0
    %1099 = vmatpush.xpose.msra.mxu0 0.0
    %1100 = vmatpush.xpose.msra.mxu0 0.0
    %1101 = vmatpush.xpose.msra.mxu0 0.0
    %1102 = vmatpush.xpose.msra.mxu0 0.0
    %1103 = vmatpush.xpose.msra.mxu0 0.0
    %1104 = vmatpush.xpose.msra.mxu0 0.0
    %1105 = vmatpush.xpose.msra.mxu0 %v1088
    %1106 = vmatmul.f32.gmra.mxu0 %v1086
    %v1107 = vpop.f32.mrf.mxu0
    %v1108 = vadd.f32 %v1026, %v1107
    %1109 = vdwg.mxu0
    %1110 = vrot.lane.b32.xlu0 %v1014, 96
    %v1111 = vpop.permute.xlu0 %1110
    %v1112 = vsel %vm136, %v1014, 0
    %v1114 = vsel %vm136, %v1111, 0
    %1116 = vmatpush.xpose.msra.mxu0 0.0
    %1117 = vmatpush.xpose.msra.mxu0 0.0
    %1118 = vmatpush.xpose.msra.mxu0 0.0
    %1119 = vmatpush.xpose.msra.mxu0 0.0
    %1120 = vmatpush.xpose.msra.mxu0 0.0
    %1121 = vmatpush.xpose.msra.mxu0 0.0
    %1122 = vmatpush.xpose.msra.mxu0 0.0
    %1123 = vmatpush.xpose.msra.mxu0 0.0
    %1124 = vmatpush.xpose.msra.mxu0 0.0
    %1125 = vmatpush.xpose.msra.mxu0 0.0
    %1126 = vmatpush.xpose.msra.mxu0 0.0
    %1127 = vmatpush.xpose.msra.mxu0 0.0
    %1128 = vmatpush.xpose.msra.mxu0 0.0
    %1129 = vmatpush.xpose.msra.mxu0 0.0
    %1130 = vmatpush.xpose.msra.mxu0 0.0
    %1131 = vmatpush.xpose.msra.mxu0 %v1114
    %1132 = vmatmul.f32.gmra.mxu0 %v1112
    %v1133 = vpop.f32.mrf.mxu0
    %v1134 = vadd.f32 %v1027, %v1133
    %1135 = vdwg.mxu0
    %1136 = vrot.lane.b32.xlu0 %v1016, 96
    %v1137 = vpop.permute.xlu0 %1136
    %v1138 = vsel %vm136, %v1016, 0
    %v1140 = vsel %vm136, %v1137, 0
    %1142 = vmatpush.xpose.msra.mxu0 0.0
    %1143 = vmatpush.xpose.msra.mxu0 0.0
    %1144 = vmatpush.xpose.msra.mxu0 0.0
    %1145 = vmatpush.xpose.msra.mxu0 0.0
    %1146 = vmatpush.xpose.msra.mxu0 0.0
    %1147 = vmatpush.xpose.msra.mxu0 0.0
    %1148 = vmatpush.xpose.msra.mxu0 0.0
    %1149 = vmatpush.xpose.msra.mxu0 0.0
    %1150 = vmatpush.xpose.msra.mxu0 0.0
    %1151 = vmatpush.xpose.msra.mxu0 0.0
    %1152 = vmatpush.xpose.msra.mxu0 0.0
    %1153 = vmatpush.xpose.msra.mxu0 0.0
    %1154 = vmatpush.xpose.msra.mxu0 0.0
    %1155 = vmatpush.xpose.msra.mxu0 0.0
    %1156 = vmatpush.xpose.msra.mxu0 0.0
    %1157 = vmatpush.xpose.msra.mxu0 %v1140
    %1158 = vmatmul.f32.gmra.mxu0 %v1138
    %v1159 = vpop.f32.mrf.mxu0
    %v1160 = vadd.f32 %v1028, %v1159
    %1161 = vdwg.mxu0
    %1162 = vrot.lane.b32.xlu0 %v1018, 96
    %v1163 = vpop.permute.xlu0 %1162
    %v1164 = vsel %vm136, %v1018, 0
    %v1166 = vsel %vm136, %v1163, 0
    %1168 = vmatpush.xpose.msra.mxu0 0.0
    %1169 = vmatpush.xpose.msra.mxu0 0.0
    %1170 = vmatpush.xpose.msra.mxu0 0.0
    %1171 = vmatpush.xpose.msra.mxu0 0.0
    %1172 = vmatpush.xpose.msra.mxu0 0.0
    %1173 = vmatpush.xpose.msra.mxu0 0.0
    %1174 = vmatpush.xpose.msra.mxu0 0.0
    %1175 = vmatpush.xpose.msra.mxu0 0.0
    %1176 = vmatpush.xpose.msra.mxu0 0.0
    %1177 = vmatpush.xpose.msra.mxu0 0.0
    %1178 = vmatpush.xpose.msra.mxu0 0.0
    %1179 = vmatpush.xpose.msra.mxu0 0.0
    %1180 = vmatpush.xpose.msra.mxu0 0.0
    %1181 = vmatpush.xpose.msra.mxu0 0.0
    %1182 = vmatpush.xpose.msra.mxu0 0.0
    %1183 = vmatpush.xpose.msra.mxu0 %v1166
    %1184 = vmatmul.f32.gmra.mxu0 %v1164
    %v1185 = vpop.f32.mrf.mxu0
    %v1186 = vadd.f32 %v1029, %v1185
    %1187 = vdwg.mxu0
    %1188 = vrot.lane.b32.xlu0 %v1020, 96
    %v1189 = vpop.permute.xlu0 %1188
    %v1190 = vsel %vm136, %v1020, 0
    %v1192 = vsel %vm136, %v1189, 0
    %1194 = vmatpush.xpose.msra.mxu0 0.0
    %1195 = vmatpush.xpose.msra.mxu0 0.0
    %1196 = vmatpush.xpose.msra.mxu0 0.0
    %1197 = vmatpush.xpose.msra.mxu0 0.0
    %1198 = vmatpush.xpose.msra.mxu0 0.0
    %1199 = vmatpush.xpose.msra.mxu0 0.0
    %1200 = vmatpush.xpose.msra.mxu0 0.0
    %1201 = vmatpush.xpose.msra.mxu0 0.0
    %1202 = vmatpush.xpose.msra.mxu0 0.0
    %1203 = vmatpush.xpose.msra.mxu0 0.0
    %1204 = vmatpush.xpose.msra.mxu0 0.0
    %1205 = vmatpush.xpose.msra.mxu0 0.0
    %1206 = vmatpush.xpose.msra.mxu0 0.0
    %1207 = vmatpush.xpose.msra.mxu0 0.0
    %1208 = vmatpush.xpose.msra.mxu0 0.0
    %1209 = vmatpush.xpose.msra.mxu0 %v1192
    %1210 = vmatmul.f32.gmra.mxu0 %v1190
    %v1211 = vpop.f32.mrf.mxu0
    %v1212 = vadd.f32 %v1030, %v1211
    %1213 = vdwg.mxu0
    %1214 = vrot.lane.b32.xlu0 %v1022, 96
    %v1215 = vpop.permute.xlu0 %1214
    %v1216 = vsel %vm136, %v1022, 0
    %v1218 = vsel %vm136, %v1215, 0
    %1220 = vmatpush.xpose.msra.mxu0 0.0
    %1221 = vmatpush.xpose.msra.mxu0 0.0
    %1222 = vmatpush.xpose.msra.mxu0 0.0
    %1223 = vmatpush.xpose.msra.mxu0 0.0
    %1224 = vmatpush.xpose.msra.mxu0 0.0
    %1225 = vmatpush.xpose.msra.mxu0 0.0
    %1226 = vmatpush.xpose.msra.mxu0 0.0
    %1227 = vmatpush.xpose.msra.mxu0 0.0
    %1228 = vmatpush.xpose.msra.mxu0 0.0
    %1229 = vmatpush.xpose.msra.mxu0 0.0
    %1230 = vmatpush.xpose.msra.mxu0 0.0
    %1231 = vmatpush.xpose.msra.mxu0 0.0
    %1232 = vmatpush.xpose.msra.mxu0 0.0
    %1233 = vmatpush.xpose.msra.mxu0 0.0
    %1234 = vmatpush.xpose.msra.mxu0 0.0
    %1235 = vmatpush.xpose.msra.mxu0 %v1218
    %1236 = vmatmul.f32.gmra.mxu0 %v1216
    %v1237 = vpop.f32.mrf.mxu0
    %v1238 = vadd.f32 %v1031, %v1237
    %1239 = vdwg.mxu0
    %v1240 = vsel %vm136, %v1056, -inf
    %1241 = vmax.xlane.f32.xlu0 %v1240
    %v1242 = vpop.xlane.xlu0 %1241
    %v1243 = vsel %vm136, %v1082, -inf
    %1244 = vmax.xlane.f32.xlu0 %v1243
    %v1245 = vpop.xlane.xlu0 %1244
    %v1246 = vsel %vm136, %v1108, -inf
    %1247 = vmax.xlane.f32.xlu0 %v1246
    %v1248 = vpop.xlane.xlu0 %1247
    %v1249 = vsel %vm136, %v1134, -inf
    %1250 = vmax.xlane.f32.xlu0 %v1249
    %v1251 = vpop.xlane.xlu0 %1250
    %v1252 = vsel %vm136, %v1160, -inf
    %1253 = vmax.xlane.f32.xlu0 %v1252
    %v1254 = vpop.xlane.xlu0 %1253
    %v1255 = vsel %vm136, %v1186, -inf
    %1256 = vmax.xlane.f32.xlu0 %v1255
    %v1257 = vpop.xlane.xlu0 %1256
    %v1258 = vsel %vm136, %v1212, -inf
    %1259 = vmax.xlane.f32.xlu0 %v1258
    %v1260 = vpop.xlane.xlu0 %1259
    %v1261 = vsel %vm136, %v1238, -inf
    %1262 = vmax.xlane.f32.xlu0 %v1261
    %v1263 = vpop.xlane.xlu0 %1262
    %v1264 = vsub.f32 %v1056, %v1242
    %v1265 = vsub.f32 %v1082, %v1245
    %v1266 = vsub.f32 %v1108, %v1248
    %v1267 = vsub.f32 %v1134, %v1251
    %v1268 = vsub.f32 %v1160, %v1254
    %v1269 = vsub.f32 %v1186, %v1257
    %v1270 = vsub.f32 %v1212, %v1260
    %v1271 = vsub.f32 %v1238, %v1263
    %v1272 = vmul.f32 %v1264, 1.442695
    %v1273 = vpow.pop %v1272
    %v1274 = vmul.f32 %v1265, 1.442695
    %v1275 = vpow.pop %v1274
    %v1276 = vmul.f32 %v1266, 1.442695
    %v1277 = vpow.pop %v1276
    %v1278 = vmul.f32 %v1267, 1.442695
    %v1279 = vpow.pop %v1278
    %v1280 = vmul.f32 %v1268, 1.442695
    %v1281 = vpow.pop %v1280
    %v1282 = vmul.f32 %v1269, 1.442695
    %v1283 = vpow.pop %v1282
    %v1284 = vmul.f32 %v1270, 1.442695
    %v1285 = vpow.pop %v1284
    %v1286 = vmul.f32 %v1271, 1.442695
    %v1287 = vpow.pop %v1286
    %v1288 = vsel %vm136, %v1273, 0.0
    %1289 = vadd.xlane.f32.xlu0 %v1288
    %v1290 = vpop.xlane.xlu0 %1289
    %v1291 = vsel %vm136, %v1275, 0.0
    %1292 = vadd.xlane.f32.xlu0 %v1291
    %v1293 = vpop.xlane.xlu0 %1292
    %v1294 = vsel %vm136, %v1277, 0.0
    %1295 = vadd.xlane.f32.xlu0 %v1294
    %v1296 = vpop.xlane.xlu0 %1295
    %v1297 = vsel %vm136, %v1279, 0.0
    %1298 = vadd.xlane.f32.xlu0 %v1297
    %v1299 = vpop.xlane.xlu0 %1298
    %v1300 = vsel %vm136, %v1281, 0.0
    %1301 = vadd.xlane.f32.xlu0 %v1300
    %v1302 = vpop.xlane.xlu0 %1301
    %v1303 = vsel %vm136, %v1283, 0.0
    %1304 = vadd.xlane.f32.xlu0 %v1303
    %v1305 = vpop.xlane.xlu0 %1304
    %v1306 = vsel %vm136, %v1285, 0.0
    %1307 = vadd.xlane.f32.xlu0 %v1306
    %v1308 = vpop.xlane.xlu0 %1307
    %v1309 = vsel %vm136, %v1287, 0.0
    %1310 = vadd.xlane.f32.xlu0 %v1309
    %v1311 = vpop.xlane.xlu0 %1310
    %v1312 = vrcp.pop %v1290
    %v1313 = vmul.f32 %v1290, %v1312
    %v1314 = vsub.f32 1.0, %v1313
    %v1315 = vmul.f32 %v1312, %v1314
    %v1316 = vadd.f32 %v1312, %v1315
    %vm1317 = vweird.f32 %v1290
    %vm1318 = vweird.f32 %v1312
    %vm1319 = vmor %vm1317, %vm1318
    %v1320 = vsel %vm1319, %v1312, %v1316
    %v1321 = vand.u32 2147483647, %v1290
    %vm1322 = vcmp.eq.f32.partialorder %v1321, 8.507059e+37
    %v1323 = vand.u32 %v1290, 2147483648
    %v1324 = vor.u32 1.1754944e-38, %v1323
    %v1325 = vsel %vm1322, %v1324, %v1320
    %v1326 = vmul.f32 %v1273, %v1325
    %v1327 = vrcp.pop %v1293
    %v1328 = vmul.f32 %v1293, %v1327
    %v1329 = vsub.f32 1.0, %v1328
    %v1330 = vmul.f32 %v1327, %v1329
    %v1331 = vadd.f32 %v1327, %v1330
    %vm1332 = vweird.f32 %v1293
    %vm1333 = vweird.f32 %v1327
    %vm1334 = vmor %vm1332, %vm1333
    %v1335 = vsel %vm1334, %v1327, %v1331
    %v1336 = vand.u32 2147483647, %v1293
    %vm1337 = vcmp.eq.f32.partialorder %v1336, 8.507059e+37
    %v1338 = vand.u32 %v1293, 2147483648
    %v1339 = vor.u32 1.1754944e-38, %v1338
    %v1340 = vsel %vm1337, %v1339, %v1335
    %v1341 = vmul.f32 %v1275, %v1340
    %v1342 = vrcp.pop %v1296
    %v1343 = vmul.f32 %v1296, %v1342
    %v1344 = vsub.f32 1.0, %v1343
    %v1345 = vmul.f32 %v1342, %v1344
    %v1346 = vadd.f32 %v1342, %v1345
    %vm1347 = vweird.f32 %v1296
    %vm1348 = vweird.f32 %v1342
    %vm1349 = vmor %vm1347, %vm1348
    %v1350 = vsel %vm1349, %v1342, %v1346
    %v1351 = vand.u32 2147483647, %v1296
    %vm1352 = vcmp.eq.f32.partialorder %v1351, 8.507059e+37
    %v1353 = vand.u32 %v1296, 2147483648
    %v1354 = vor.u32 1.1754944e-38, %v1353
    %v1355 = vsel %vm1352, %v1354, %v1350
    %v1356 = vmul.f32 %v1277, %v1355
    %v1357 = vrcp.pop %v1299
    %v1358 = vmul.f32 %v1299, %v1357
    %v1359 = vsub.f32 1.0, %v1358
    %v1360 = vmul.f32 %v1357, %v1359
    %v1361 = vadd.f32 %v1357, %v1360
    %vm1362 = vweird.f32 %v1299
    %vm1363 = vweird.f32 %v1357
    %vm1364 = vmor %vm1362, %vm1363
    %v1365 = vsel %vm1364, %v1357, %v1361
    %v1366 = vand.u32 2147483647, %v1299
    %vm1367 = vcmp.eq.f32.partialorder %v1366, 8.507059e+37
    %v1368 = vand.u32 %v1299, 2147483648
    %v1369 = vor.u32 1.1754944e-38, %v1368
    %v1370 = vsel %vm1367, %v1369, %v1365
    %v1371 = vmul.f32 %v1279, %v1370
    %v1372 = vrcp.pop %v1302
    %v1373 = vmul.f32 %v1302, %v1372
    %v1374 = vsub.f32 1.0, %v1373
    %v1375 = vmul.f32 %v1372, %v1374
    %v1376 = vadd.f32 %v1372, %v1375
    %vm1377 = vweird.f32 %v1302
    %vm1378 = vweird.f32 %v1372
    %vm1379 = vmor %vm1377, %vm1378
    %v1380 = vsel %vm1379, %v1372, %v1376
    %v1381 = vand.u32 2147483647, %v1302
    %vm1382 = vcmp.eq.f32.partialorder %v1381, 8.507059e+37
    %v1383 = vand.u32 %v1302, 2147483648
    %v1384 = vor.u32 1.1754944e-38, %v1383
    %v1385 = vsel %vm1382, %v1384, %v1380
    %v1386 = vmul.f32 %v1281, %v1385
    %v1387 = vrcp.pop %v1305
    %v1388 = vmul.f32 %v1305, %v1387
    %v1389 = vsub.f32 1.0, %v1388
    %v1390 = vmul.f32 %v1387, %v1389
    %v1391 = vadd.f32 %v1387, %v1390
    %vm1392 = vweird.f32 %v1305
    %vm1393 = vweird.f32 %v1387
    %vm1394 = vmor %vm1392, %vm1393
    %v1395 = vsel %vm1394, %v1387, %v1391
    %v1396 = vand.u32 2147483647, %v1305
    %vm1397 = vcmp.eq.f32.partialorder %v1396, 8.507059e+37
    %v1398 = vand.u32 %v1305, 2147483648
    %v1399 = vor.u32 1.1754944e-38, %v1398
    %v1400 = vsel %vm1397, %v1399, %v1395
    %v1401 = vmul.f32 %v1283, %v1400
    %v1402 = vrcp.pop %v1308
    %v1403 = vmul.f32 %v1308, %v1402
    %v1404 = vsub.f32 1.0, %v1403
    %v1405 = vmul.f32 %v1402, %v1404
    %v1406 = vadd.f32 %v1402, %v1405
    %vm1407 = vweird.f32 %v1308
    %vm1408 = vweird.f32 %v1402
    %vm1409 = vmor %vm1407, %vm1408
    %v1410 = vsel %vm1409, %v1402, %v1406
    %v1411 = vand.u32 2147483647, %v1308
    %vm1412 = vcmp.eq.f32.partialorder %v1411, 8.507059e+37
    %v1413 = vand.u32 %v1308, 2147483648
    %v1414 = vor.u32 1.1754944e-38, %v1413
    %v1415 = vsel %vm1412, %v1414, %v1410
    %v1416 = vmul.f32 %v1285, %v1415
    %v1417 = vrcp.pop %v1311
    %v1418 = vmul.f32 %v1311, %v1417
    %v1419 = vsub.f32 1.0, %v1418
    %v1420 = vmul.f32 %v1417, %v1419
    %v1421 = vadd.f32 %v1417, %v1420
    %vm1422 = vweird.f32 %v1311
    %vm1423 = vweird.f32 %v1417
    %vm1424 = vmor %vm1422, %vm1423
    %v1425 = vsel %vm1424, %v1417, %v1421
    %v1426 = vand.u32 2147483647, %v1311
    %vm1427 = vcmp.eq.f32.partialorder %v1426, 8.507059e+37
    %v1428 = vand.u32 %v1311, 2147483648
    %v1429 = vor.u32 1.1754944e-38, %v1428
    %v1430 = vsel %vm1427, %v1429, %v1425
    %v1431 = vmul.f32 %v1287, %v1430
    %s1432 = scalar_lea.vmem %s8, 64
    %1433 = vst.msk [vmem:[%s1432] sm:$0xff] %vm136, %v1326
    %1434 = vst.msk [vmem:[%s1432 + $0x8] sm:$0xff] %vm136, %v1341
    %1435 = vst.msk [vmem:[%s1432 + $0x10] sm:$0xff] %vm136, %v1356
    %1436 = vst.msk [vmem:[%s1432 + $0x18] sm:$0xff] %vm136, %v1371
    %1437 = vst.msk [vmem:[%s1432 + $0x20] sm:$0xff] %vm136, %v1386
    %1438 = vst.msk [vmem:[%s1432 + $0x28] sm:$0xff] %vm136, %v1401
    %1439 = vst.msk [vmem:[%s1432 + $0x30] sm:$0xff] %vm136, %v1416
    %1440 = vst.msk [vmem:[%s1432 + $0x38] sm:$0xff] %vm136, %v1431
    %1441 = vrot.lane.b32.xlu0 %v1004, 64
    %v1442 = vpop.permute.xlu0 %1441
    %v1445 = vsel %vm136, %v1326, 0
    %1447 = vmatpush.msra.mxu0 0.0
    %1448 = vmatpush.msra.mxu0 0.0
    %1449 = vmatpush.msra.mxu0 0.0
    %1450 = vmatpush.msra.mxu0 0.0
    %1451 = vmatpush.msra.mxu0 0.0
    %1452 = vmatpush.msra.mxu0 0.0
    %1453 = vmatpush.msra.mxu0 0.0
    %1454 = vmatpush.msra.mxu0 0.0
    %1455 = vmatpush.msra.mxu0 0.0
    %1456 = vmatpush.msra.mxu0 0.0
    %1457 = vmatpush.msra.mxu0 0.0
    %1458 = vmatpush.msra.mxu0 0.0
    %1459 = vmatpush.msra.mxu0 0.0
    %1460 = vmatpush.msra.mxu0 0.0
    %1461 = vmatpush.msra.mxu0 0.0
    %1462 = vmatpush.msra.mxu0 %v1442
    %1463 = vmatmul.f32.gmra.mxu0 %v1445
    %v1464 = vpop.f32.mrf.mxu0
    %v1465 = vadd.f32 0.0, %v1464
    %1466 = vdwg.mxu0
    %1467 = vrot.lane.b32.xlu0 %v1007, 64
    %v1468 = vpop.permute.xlu0 %1467
    %v1471 = vsel %vm136, %v1341, 0
    %1473 = vmatpush.msra.mxu0 0.0
    %1474 = vmatpush.msra.mxu0 0.0
    %1475 = vmatpush.msra.mxu0 0.0
    %1476 = vmatpush.msra.mxu0 0.0
    %1477 = vmatpush.msra.mxu0 0.0
    %1478 = vmatpush.msra.mxu0 0.0
    %1479 = vmatpush.msra.mxu0 0.0
    %1480 = vmatpush.msra.mxu0 0.0
    %1481 = vmatpush.msra.mxu0 0.0
    %1482 = vmatpush.msra.mxu0 0.0
    %1483 = vmatpush.msra.mxu0 0.0
    %1484 = vmatpush.msra.mxu0 0.0
    %1485 = vmatpush.msra.mxu0 0.0
    %1486 = vmatpush.msra.mxu0 0.0
    %1487 = vmatpush.msra.mxu0 0.0
    %1488 = vmatpush.msra.mxu0 %v1468
    %1489 = vmatmul.f32.gmra.mxu0 %v1471
    %v1490 = vpop.f32.mrf.mxu0
    %v1491 = vadd.f32 0.0, %v1490
    %1492 = vdwg.mxu0
    %1493 = vrot.lane.b32.xlu0 %v1012, 64
    %v1494 = vpop.permute.xlu0 %1493
    %v1497 = vsel %vm136, %v1356, 0
    %1499 = vmatpush.msra.mxu0 0.0
    %1500 = vmatpush.msra.mxu0 0.0
    %1501 = vmatpush.msra.mxu0 0.0
    %1502 = vmatpush.msra.mxu0 0.0
    %1503 = vmatpush.msra.mxu0 0.0
    %1504 = vmatpush.msra.mxu0 0.0
    %1505 = vmatpush.msra.mxu0 0.0
    %1506 = vmatpush.msra.mxu0 0.0
    %1507 = vmatpush.msra.mxu0 0.0
    %1508 = vmatpush.msra.mxu0 0.0
    %1509 = vmatpush.msra.mxu0 0.0
    %1510 = vmatpush.msra.mxu0 0.0
    %1511 = vmatpush.msra.mxu0 0.0
    %1512 = vmatpush.msra.mxu0 0.0
    %1513 = vmatpush.msra.mxu0 0.0
    %1514 = vmatpush.msra.mxu0 %v1494
    %1515 = vmatmul.f32.gmra.mxu0 %v1497
    %v1516 = vpop.f32.mrf.mxu0
    %v1517 = vadd.f32 0.0, %v1516
    %1518 = vdwg.mxu0
    %1519 = vrot.lane.b32.xlu0 %v1014, 64
    %v1520 = vpop.permute.xlu0 %1519
    %v1523 = vsel %vm136, %v1371, 0
    %1525 = vmatpush.msra.mxu0 0.0
    %1526 = vmatpush.msra.mxu0 0.0
    %1527 = vmatpush.msra.mxu0 0.0
    %1528 = vmatpush.msra.mxu0 0.0
    %1529 = vmatpush.msra.mxu0 0.0
    %1530 = vmatpush.msra.mxu0 0.0
    %1531 = vmatpush.msra.mxu0 0.0
    %1532 = vmatpush.msra.mxu0 0.0
    %1533 = vmatpush.msra.mxu0 0.0
    %1534 = vmatpush.msra.mxu0 0.0
    %1535 = vmatpush.msra.mxu0 0.0
    %1536 = vmatpush.msra.mxu0 0.0
    %1537 = vmatpush.msra.mxu0 0.0
    %1538 = vmatpush.msra.mxu0 0.0
    %1539 = vmatpush.msra.mxu0 0.0
    %1540 = vmatpush.msra.mxu0 %v1520
    %1541 = vmatmul.f32.gmra.mxu0 %v1523
    %v1542 = vpop.f32.mrf.mxu0
    %v1543 = vadd.f32 0.0, %v1542
    %1544 = vdwg.mxu0
    %1545 = vrot.lane.b32.xlu0 %v1016, 64
    %v1546 = vpop.permute.xlu0 %1545
    %v1549 = vsel %vm136, %v1386, 0
    %1551 = vmatpush.msra.mxu0 0.0
    %1552 = vmatpush.msra.mxu0 0.0
    %1553 = vmatpush.msra.mxu0 0.0
    %1554 = vmatpush.msra.mxu0 0.0
    %1555 = vmatpush.msra.mxu0 0.0
    %1556 = vmatpush.msra.mxu0 0.0
    %1557 = vmatpush.msra.mxu0 0.0
    %1558 = vmatpush.msra.mxu0 0.0
    %1559 = vmatpush.msra.mxu0 0.0
    %1560 = vmatpush.msra.mxu0 0.0
    %1561 = vmatpush.msra.mxu0 0.0
    %1562 = vmatpush.msra.mxu0 0.0
    %1563 = vmatpush.msra.mxu0 0.0
    %1564 = vmatpush.msra.mxu0 0.0
    %1565 = vmatpush.msra.mxu0 0.0
    %1566 = vmatpush.msra.mxu0 %v1546
    %1567 = vmatmul.f32.gmra.mxu0 %v1549
    %v1568 = vpop.f32.mrf.mxu0
    %v1569 = vadd.f32 0.0, %v1568
    %1570 = vdwg.mxu0
    %1571 = vrot.lane.b32.xlu0 %v1018, 64
    %v1572 = vpop.permute.xlu0 %1571
    %v1575 = vsel %vm136, %v1401, 0
    %1577 = vmatpush.msra.mxu0 0.0
    %1578 = vmatpush.msra.mxu0 0.0
    %1579 = vmatpush.msra.mxu0 0.0
    %1580 = vmatpush.msra.mxu0 0.0
    %1581 = vmatpush.msra.mxu0 0.0
    %1582 = vmatpush.msra.mxu0 0.0
    %1583 = vmatpush.msra.mxu0 0.0
    %1584 = vmatpush.msra.mxu0 0.0
    %1585 = vmatpush.msra.mxu0 0.0
    %1586 = vmatpush.msra.mxu0 0.0
    %1587 = vmatpush.msra.mxu0 0.0
    %1588 = vmatpush.msra.mxu0 0.0
    %1589 = vmatpush.msra.mxu0 0.0
    %1590 = vmatpush.msra.mxu0 0.0
    %1591 = vmatpush.msra.mxu0 0.0
    %1592 = vmatpush.msra.mxu0 %v1572
    %1593 = vmatmul.f32.gmra.mxu0 %v1575
    %v1594 = vpop.f32.mrf.mxu0
    %v1595 = vadd.f32 0.0, %v1594
    %1596 = vdwg.mxu0
    %1597 = vrot.lane.b32.xlu0 %v1020, 64
    %v1598 = vpop.permute.xlu0 %1597
    %v1601 = vsel %vm136, %v1416, 0
    %1603 = vmatpush.msra.mxu0 0.0
    %1604 = vmatpush.msra.mxu0 0.0
    %1605 = vmatpush.msra.mxu0 0.0
    %1606 = vmatpush.msra.mxu0 0.0
    %1607 = vmatpush.msra.mxu0 0.0
    %1608 = vmatpush.msra.mxu0 0.0
    %1609 = vmatpush.msra.mxu0 0.0
    %1610 = vmatpush.msra.mxu0 0.0
    %1611 = vmatpush.msra.mxu0 0.0
    %1612 = vmatpush.msra.mxu0 0.0
    %1613 = vmatpush.msra.mxu0 0.0
    %1614 = vmatpush.msra.mxu0 0.0
    %1615 = vmatpush.msra.mxu0 0.0
    %1616 = vmatpush.msra.mxu0 0.0
    %1617 = vmatpush.msra.mxu0 0.0
    %1618 = vmatpush.msra.mxu0 %v1598
    %1619 = vmatmul.f32.gmra.mxu0 %v1601
    %v1620 = vpop.f32.mrf.mxu0
    %v1621 = vadd.f32 0.0, %v1620
    %1622 = vdwg.mxu0
    %1623 = vrot.lane.b32.xlu0 %v1022, 64
    %v1624 = vpop.permute.xlu0 %1623
    %v1627 = vsel %vm136, %v1431, 0
    %1629 = vmatpush.msra.mxu0 0.0
    %1630 = vmatpush.msra.mxu0 0.0
    %1631 = vmatpush.msra.mxu0 0.0
    %1632 = vmatpush.msra.mxu0 0.0
    %1633 = vmatpush.msra.mxu0 0.0
    %1634 = vmatpush.msra.mxu0 0.0
    %1635 = vmatpush.msra.mxu0 0.0
    %1636 = vmatpush.msra.mxu0 0.0
    %1637 = vmatpush.msra.mxu0 0.0
    %1638 = vmatpush.msra.mxu0 0.0
    %1639 = vmatpush.msra.mxu0 0.0
    %1640 = vmatpush.msra.mxu0 0.0
    %1641 = vmatpush.msra.mxu0 0.0
    %1642 = vmatpush.msra.mxu0 0.0
    %1643 = vmatpush.msra.mxu0 0.0
    %1644 = vmatpush.msra.mxu0 %v1624
    %1645 = vmatmul.f32.gmra.mxu0 %v1627
    %v1646 = vpop.f32.mrf.mxu0
    %v1647 = vadd.f32 0.0, %v1646
    %1648 = vdwg.mxu0
    %1651 = vrot.lane.b32.xlu0 %v1517, 8
    %v1652 = vpop.permute.xlu0 %1651
    %1653 = vrot.lane.b32.xlu0 %v1543, 8
    %v1654 = vpop.permute.xlu0 %1653
    %1659 = vrot.lane.b32.xlu0 %v1569, 16
    %v1660 = vpop.permute.xlu0 %1659
    %1661 = vrot.lane.b32.xlu0 %v1595, 16
    %v1662 = vpop.permute.xlu0 %1661
    %1667 = vrot.lane.b32.xlu0 %v1621, 24
    %v1668 = vpop.permute.xlu0 %1667
    %1669 = vrot.lane.b32.xlu0 %v1647, 24
    %v1670 = vpop.permute.xlu0 %1669
    %v1673 = vsel %vm136, %v1465, %v1652
    %v1674 = vsel %vm136, %v1491, %v1654
    %v1675 = vsel %vm777, %v1673, %v1660
    %v1676 = vsel %vm777, %v1674, %v1662
    %v1677 = vsel %vm780, %v1675, %v1668
    %v1678 = vsel %vm780, %v1676, %v1670
    %s1679 = scalar_lea.vmem %s4, 32
    %v1680 = vld [vmem:[%s1679] sm:$0xff]
    %v1681 = vld [vmem:[%s1679 + $0x8] sm:$0xff]
    %v1682 = vld [vmem:[%s1679 + $0x10] sm:$0xff]
    %v1683 = vld [vmem:[%s1679 + $0x18] sm:$0xff]
    %v1685 = vsel %vm34, %v1677, 0
    %v1688 = vsel %vm34, %v1678, 0
    %1690 = vmatpush.msra.mxu0 0.0
    %1691 = vmatpush.msra.mxu0 0.0
    %1692 = vmatpush.msra.mxu0 0.0
    %1693 = vmatpush.msra.mxu0 0.0
    %1694 = vmatpush.msra.mxu0 0.0
    %1695 = vmatpush.msra.mxu0 0.0
    %1696 = vmatpush.msra.mxu0 0.0
    %1697 = vmatpush.msra.mxu0 0.0
    %1698 = vmatpush.msra.mxu0 0.0
    %1699 = vmatpush.msra.mxu0 0.0
    %1700 = vmatpush.msra.mxu0 0.0
    %1701 = vmatpush.msra.mxu0 0.0
    %1702 = vmatpush.msra.mxu0 %v1683
    %1703 = vmatpush.msra.mxu0 %v1682
    %1704 = vmatpush.msra.mxu0 %v1681
    %1705 = vmatpush.msra.mxu0 %v1680
    %1706 = vmatmul.f32.gmra.mxu0 %v1685
    %v1707 = vpop.f32.mrf.mxu0
    %v1708 = vadd.f32 0.0, %v1707
    %1709 = vmatmul.f32.gmra.mxu0 %v1688
    %v1710 = vpop.f32.mrf.mxu0
    %v1711 = vadd.f32 0.0, %v1710
    %1712 = vdwg.mxu0
    %v1713 = vadd.f32 %v932, %v1708
    %v1714 = vadd.f32 %v933, %v1711
    %s1715 = scalar_lea.vmem %s2, 3
    %v1716 = vld [vmem:[%s1715] sm:$0x1]
    %v1717 = vmul.f32 %v1713, %v1713
    %v1718 = vmul.f32 %v1714, %v1714
    %v1719 = vsel %vm34, %v1717, 0.0
    %1720 = vadd.xlane.f32.xlu0 %v1719
    %v1721 = vpop.xlane.xlu0 %1720
    %v1722 = vsel %vm34, %v1718, 0.0
    %1723 = vadd.xlane.f32.xlu0 %v1722
    %v1724 = vpop.xlane.xlu0 %1723
    %v1725 = vmul.f32 %v1721, %v47
    %v1726 = vmul.f32 %v1724, %v47
    %v1727 = vadd.f32 %v1725, 1e-06
    %v1728 = vadd.f32 %v1726, 1e-06
    %v1729 = vrsqrt.pop %v1727
    %v1730 = vmul.f32 %v1729, %v1727
    %v1731 = vmul.f32 %v1730, %v1729
    %v1732 = vmul.f32 0.5, %v1731
    %v1733 = vsub.f32 1.5, %v1732
    %v1734 = vmul.f32 %v1729, %v1733
    %vm1735 = vweird.f32 %v1727
    %vm1736 = vweird.f32 %v1729
    %vm1737 = vmor %vm1735, %vm1736
    %v1738 = vsel %vm1737, %v1729, %v1734
    %v1739 = vrsqrt.pop %v1728
    %v1740 = vmul.f32 %v1739, %v1728
    %v1741 = vmul.f32 %v1740, %v1739
    %v1742 = vmul.f32 0.5, %v1741
    %v1743 = vsub.f32 1.5, %v1742
    %v1744 = vmul.f32 %v1739, %v1743
    %vm1745 = vweird.f32 %v1728
    %vm1746 = vweird.f32 %v1739
    %vm1747 = vmor %vm1745, %vm1746
    %v1748 = vsel %vm1747, %v1739, %v1744
    %v1749 = vmul.f32 %v1713, %v1738
    %v1750 = vmul.f32 %v1714, %v1748
    %v1752 = vperm.slane %v1716, 0
    %v1754 = vmul.f32 %v1749, %v1752
    %v1755 = vmul.f32 %v1750, %v1752
    %s1756 = scalar_lea.vmem %s5, 32
    %v1757 = vld [vmem:[%s1756] sm:$0xff]
    %v1758 = vld [vmem:[%s1756 + $0x8] sm:$0xff]
    %v1759 = vld [vmem:[%s1756 + $0x10] sm:$0xff]
    %v1760 = vld [vmem:[%s1756 + $0x18] sm:$0xff]
    %v1762 = vsel %vm34, %v1754, 0
    %v1765 = vsel %vm34, %v1755, 0
    %1767 = vmatpush.msra.mxu0 0.0
    %1768 = vmatpush.msra.mxu0 0.0
    %1769 = vmatpush.msra.mxu0 0.0
    %1770 = vmatpush.msra.mxu0 0.0
    %1771 = vmatpush.msra.mxu0 0.0
    %1772 = vmatpush.msra.mxu0 0.0
    %1773 = vmatpush.msra.mxu0 0.0
    %1774 = vmatpush.msra.mxu0 0.0
    %1775 = vmatpush.msra.mxu0 0.0
    %1776 = vmatpush.msra.mxu0 0.0
    %1777 = vmatpush.msra.mxu0 0.0
    %1778 = vmatpush.msra.mxu0 0.0
    %1779 = vmatpush.msra.mxu0 %v1760
    %1780 = vmatpush.msra.mxu0 %v1759
    %1781 = vmatpush.msra.mxu0 %v1758
    %1782 = vmatpush.msra.mxu0 %v1757
    %1783 = vmatmul.f32.gmra.mxu0 %v1762
    %v1784 = vpop.f32.mrf.mxu0
    %v1785 = vadd.f32 0.0, %v1784
    %1786 = vmatmul.f32.gmra.mxu0 %v1765
    %v1787 = vpop.f32.mrf.mxu0
    %v1788 = vadd.f32 0.0, %v1787
    %1789 = vdwg.mxu0
    %v1790 = vmax.f32 %v1785, 0.0
    %v1791 = vmax.f32 %v1788, 0.0
    %s1792 = scalar_lea.vmem %s6, 64
    %v1793 = vld [vmem:[%s1792] sm:$0xff]
    %v1794 = vld [vmem:[%s1792 + $0x8] sm:$0xff]
    %v1795 = vld [vmem:[%s1792 + $0x10] sm:$0xff]
    %v1796 = vld [vmem:[%s1792 + $0x18] sm:$0xff]
    %v1797 = vld [vmem:[%s1792 + $0x20] sm:$0xff]
    %v1798 = vld [vmem:[%s1792 + $0x28] sm:$0xff]
    %v1799 = vld [vmem:[%s1792 + $0x30] sm:$0xff]
    %v1800 = vld [vmem:[%s1792 + $0x38] sm:$0xff]
    %v1802 = vsel %vm902, %v1790, 0
    %v1805 = vsel %vm902, %v1791, 0
    %1807 = vmatpush.msra.mxu0 0.0
    %1808 = vmatpush.msra.mxu0 0.0
    %1809 = vmatpush.msra.mxu0 0.0
    %1810 = vmatpush.msra.mxu0 0.0
    %1811 = vmatpush.msra.mxu0 0.0
    %1812 = vmatpush.msra.mxu0 0.0
    %1813 = vmatpush.msra.mxu0 0.0
    %1814 = vmatpush.msra.mxu0 0.0
    %1815 = vmatpush.msra.mxu0 %v1800
    %1816 = vmatpush.msra.mxu0 %v1799
    %1817 = vmatpush.msra.mxu0 %v1798
    %1818 = vmatpush.msra.mxu0 %v1797
    %1819 = vmatpush.msra.mxu0 %v1796
    %1820 = vmatpush.msra.mxu0 %v1795
    %1821 = vmatpush.msra.mxu0 %v1794
    %1822 = vmatpush.msra.mxu0 %v1793
    %1823 = vmatmul.f32.gmra.mxu0 %v1802
    %v1824 = vpop.f32.mrf.mxu0
    %v1825 = vadd.f32 0.0, %v1824
    %1826 = vmatmul.f32.gmra.mxu0 %v1805
    %v1827 = vpop.f32.mrf.mxu0
    %v1828 = vadd.f32 0.0, %v1827
    %1829 = vdwg.mxu0
    %v1830 = vadd.f32 %v1713, %v1825
    %v1831 = vadd.f32 %v1714, %v1828
    %s1832 = scalar_lea.vmem %s2, 4
    %v1833 = vld [vmem:[%s1832] sm:$0x1]
    %v1834 = vmul.f32 %v1830, %v1830
    %v1835 = vmul.f32 %v1831, %v1831
    %v1836 = vsel %vm34, %v1834, 0.0
    %1837 = vadd.xlane.f32.xlu0 %v1836
    %v1838 = vpop.xlane.xlu0 %1837
    %v1839 = vsel %vm34, %v1835, 0.0
    %1840 = vadd.xlane.f32.xlu0 %v1839
    %v1841 = vpop.xlane.xlu0 %1840
    %v1842 = vmul.f32 %v1838, %v47
    %v1843 = vmul.f32 %v1841, %v47
    %v1844 = vadd.f32 %v1842, 1e-06
    %v1845 = vadd.f32 %v1843, 1e-06
    %v1846 = vrsqrt.pop %v1844
    %v1847 = vmul.f32 %v1846, %v1844
    %v1848 = vmul.f32 %v1847, %v1846
    %v1849 = vmul.f32 0.5, %v1848
    %v1850 = vsub.f32 1.5, %v1849
    %v1851 = vmul.f32 %v1846, %v1850
    %vm1852 = vweird.f32 %v1844
    %vm1853 = vweird.f32 %v1846
    %vm1854 = vmor %vm1852, %vm1853
    %v1855 = vsel %vm1854, %v1846, %v1851
    %v1856 = vrsqrt.pop %v1845
    %v1857 = vmul.f32 %v1856, %v1845
    %v1858 = vmul.f32 %v1857, %v1856
    %v1859 = vmul.f32 0.5, %v1858
    %v1860 = vsub.f32 1.5, %v1859
    %v1861 = vmul.f32 %v1856, %v1860
    %vm1862 = vweird.f32 %v1845
    %vm1863 = vweird.f32 %v1856
    %vm1864 = vmor %vm1862, %vm1863
    %v1865 = vsel %vm1864, %v1856, %v1861
    %v1866 = vmul.f32 %v1830, %v1855
    %v1867 = vmul.f32 %v1831, %v1865
    %v1869 = vperm.slane %v1833, 0
    %v1871 = vmul.f32 %v1866, %v1869
    %v1872 = vmul.f32 %v1867, %v1869
    %1873 = vst.msk [vmem:[#allocation2] sm:$0xff] %vm34, %v1871
    %1874 = vst.msk [vmem:[#allocation2 + $0x8] sm:$0xff] %vm34, %v1872
    // Predicated region
    $region30: #{t5_encoder.1} parent=1 // pred_check
      _
    $region31: #{t5_encoder.1} parent=1 // pred_check_branch
      %1876 = sbr.rel (0) target = $region33
    $region32: #{t5_encoder.1} parent=1 // pred_region
      %1878 = vsyncadd [#allocation3], 0
      %s1879 = sshll.u32 [#allocation2], 4
      %s1880 = int_to_ptr.vmem [resolvable:$true] %s1879
      %s1881 = sshll.u32 %s7, 4
      %s1882 = int_to_ptr.hbm [resolvable:$true] %s1881
      %1887 = dma.vmem_to_hbm [thread:$0]  %s1880, 256, %s1882, [#allocation3], 128, 128, 8
    $region33: #{t5_encoder.1} parent=1 // pred_fallthru
      _
    // Predicated region
    $region34: #{t5_encoder.1} parent=1 // pred_check
      _
    $region35: #{t5_encoder.1} parent=1 // pred_check_branch
      %1889 = sbr.rel (0) target = $region37
    $region36: #{t5_encoder.1} parent=1 // pred_region
      _
    $region37: #{t5_encoder.1} parent=1 // pred_fallthru
      _
    // Predicated region
    $region38: #{t5_encoder.1} parent=1 // pred_check
      _
    $region39: #{t5_encoder.1} parent=1 // pred_check_branch
      %1891 = sbr.rel (0) target = $region41
    $region40: #{t5_encoder.1} parent=1 // pred_region
      %1893 = dma.done [#allocation3], 256
    $region41: #{t5_encoder.1} parent=1 // pred_fallthru
      _
    // Predicated region
    $region42: #{t5_encoder.1} parent=1 // pred_check
      _
    $region43: #{t5_encoder.1} parent=1 // pred_check_branch
      %1895 = sbr.rel (0) target = $region45
    $region44: #{t5_encoder.1} parent=1 // pred_region
      _
    $region45: #{t5_encoder.1} parent=1 // pred_fallthru
      _
    %1896 = vsyncpa [#allocation3], 1

</llo_original>
